<compile_context>
chip_gen: v6e
topology: v6e:2x2x1
jax: 0.10.0
libtpu: 0.0.40
codegen_flags: <defaults>
</compile_context>

<pallas_src>
import math
import functools

import jax
import jax.numpy as jnp
from jax import lax
from jax.experimental import pallas as pl
from jax.experimental.pallas import tpu as pltpu


def _relation_attention_kernel(bias_ref, h_ref, wqkv_ref, bqkv_ref, o_ref,
                               *, nhead, head_dim, compute_dtype):
    """Per-grid-step attention over a small block of batch elements.

    bias_ref : (Bt, Lq, Lq) additive mask bias (0 / -1e9), bf16
    h_ref    : (Bt, Lq, E)  activations (f32)
    wqkv_ref : (E, 3E)      fused [Wq^T | Wk^T | Wv^T] in compute dtype
    bqkv_ref : (1, 3E)      fused bias (f32)
    o_ref    : (Bt, Lq, E)  output
    """
    E = nhead * head_dim
    scale = 1.0 / math.sqrt(head_dim)
    w = wqkv_ref[...]                       # hoisted: stays in vregs across Bt
    bvec = bqkv_ref[...]                    # (1, 3E) f32
    nt_dims = (((1,), (1,)), ((), ()))      # contract last-with-last (no .T)

    bt_count = h_ref.shape[0]
    for bt in range(bt_count):              # small, unrolled at trace time
        h = h_ref[bt]                                              # (Lq, E) f32
        # One fused projection matmul: (Lq, E) @ (E, 3E) -> (Lq, 3E), f32 acc.
        qkv = jnp.dot(h.astype(compute_dtype), w,
                      preferred_element_type=jnp.float32) + bvec
        bias = bias_ref[bt].astype(jnp.float32)                    # (Lq, Lq)

        outs = []
        for hd in range(nhead):             # small, unrolled at trace time
            lo = hd * head_dim
            hi = lo + head_dim
            q = (qkv[:, lo:hi] * scale).astype(compute_dtype)      # (Lq, dh)
            k = qkv[:, E + lo:E + hi].astype(compute_dtype)
            v = qkv[:, 2 * E + lo:2 * E + hi].astype(compute_dtype)
            # scores: contract on dh without an explicit transpose of k
            s = lax.dot_general(q, k, nt_dims,
                                preferred_element_type=jnp.float32)
            s = s + bias                                           # additive mask
            s_max = jnp.max(s, axis=-1, keepdims=True)
            e = jnp.exp(s - s_max)
            denom = jnp.sum(e, axis=-1, keepdims=True)
            p = e * pl.reciprocal(denom, approx=True)              # EUP slot
            outs.append(jnp.dot(p.astype(compute_dtype), v,
                                preferred_element_type=jnp.float32))
        # Build the full (Lq, E) result, add the residual once, and do a single
        # lane-dense store (no dh-wide masked partial stores).
        o = jnp.concatenate(outs, axis=-1) + h
        o_ref[bt] = o.astype(o_ref.dtype)


def _construct_graph_mask(segments, query):
    """JAX port of RelationAttention.construct_graph (done under no_grad in torch).
    segments: (bz, Lq, 2) in (midpoint, length); query: (bz, Lq, E).
    Returns bool (bz, Lq, Lq), True = masked (-inf)."""
    # TODO(synk): ml2se / segment_iou are external helpers in the original repo;
    # implemented here with standard midpoint-length -> start-end and 1-D IoU.
    bz, Lq = segments.shape[0], segments.shape[1]
    eye = jnp.broadcast_to(jnp.eye(Lq, dtype=bool)[None], (bz, Lq, Lq))
    start = segments[..., 0] - segments[..., 1] / 2.0
    end = segments[..., 0] + segments[..., 1] / 2.0
    s1, e1 = start[:, :, None], end[:, :, None]
    s2, e2 = start[:, None, :], end[:, None, :]
    inter = jnp.clip(jnp.minimum(e1, e2) - jnp.maximum(s1, s2), 0.0, None)
    union = (e1 - s1) + (e2 - s2) - inter
    iou = inter / jnp.maximum(union, 1e-9)
    adj = eye | (iou <= 0.2)                       # adj_matrix[iou <= 0.2] = 1
    qn = query / jnp.maximum(
        jnp.sqrt(jnp.sum(query * query, axis=-1, keepdims=True)), 1e-8)
    cos = jnp.einsum("bid,bjd->bij", qn, qn)
    adj = jnp.where(cos <= 0.2, False, adj)        # adj_matrix[cos <= 0.2] = 0
    return ~adj


def relation_attention(query, reference, params, nhead, *,
                       compute_dtype=jnp.bfloat16, batch_tile=None):
    """query: (Lq, bz, E); reference: (bz, Lq, 2) segments (or another last-dim
    size for the unmasked path).  Returns (Lq, bz, E)."""
    Lq, bz, E = query.shape
    assert E % nhead == 0
    head_dim = E // nhead
    h = jnp.transpose(query, (1, 0, 2))                              # (bz, Lq, E)

    # Adjacency mask -> additive bias, per batch element only (no head axis).
    if reference.shape[-1] == 2:
        masked = _construct_graph_mask(reference, h)                 # (bz, Lq, Lq)
    else:
        masked = jnp.zeros((bz, Lq, Lq), dtype=bool)
    bias = jnp.where(masked, -1e9, 0.0).astype(jnp.bfloat16)         # finite; no NaN rows

    # nn.Linear computes x @ W.T + b with W of shape (out, in); pre-transpose
    # and fuse Q|K|V into one (E, 3E) weight + (1, 3E) bias.
    wqkv = jnp.concatenate(
        [params["wq"].T, params["wk"].T, params["wv"].T], axis=1
    ).astype(compute_dtype)                                          # (E, 3E)
    bqkv = jnp.concatenate(
        [params["bq"], params["bk"], params["bv"]]
    ).reshape(1, 3 * E).astype(jnp.float32)                          # (1, 3E)

    # Block a few batch elements per grid step (amortize step overhead).
    if batch_tile is None:
        batch_tile = bz if bz <= 8 else 1
    batch_tile = max(1, min(batch_tile, bz))
    while bz % batch_tile:                                           # keep divisible
        batch_tile -= 1
    grid = (bz // batch_tile,)
    # TODO(synk): for large Lq / nhead (v7x 64 MiB VMEM), add query-tile and
    # head grid axes so the (Lq, Lq) bias block is tiled; not needed here.

    kernel = functools.partial(_relation_attention_kernel,
                               nhead=nhead, head_dim=head_dim,
                               compute_dtype=compute_dtype)
    out = pl.pallas_call(
        kernel,
        out_shape=jax.ShapeDtypeStruct((bz, Lq, E), query.dtype),
        grid_spec=pltpu.PrefetchScalarGridSpec(
            num_scalar_prefetch=0,
            grid=grid,
            in_specs=[
                pl.BlockSpec((batch_tile, Lq, Lq), lambda i: (i, 0, 0)),  # bias
                pl.BlockSpec((batch_tile, Lq, E), lambda i: (i, 0, 0)),   # h
                pl.BlockSpec((E, 3 * E), lambda i: (0, 0)),               # Wqkv
                pl.BlockSpec((1, 3 * E), lambda i: (0, 0)),               # bqkv
            ],
            out_specs=pl.BlockSpec((batch_tile, Lq, E), lambda i: (i, 0, 0)),
        ),
        compiler_params=pltpu.CompilerParams(dimension_semantics=("parallel",)),
    )(bias, h, wqkv, bqkv)
    return jnp.transpose(out, (1, 0, 2))                             # (Lq, bz, E)


def _reference_forward(query, reference, params, nhead):
    """Pure-JAX reference of the PyTorch forward for a correctness check."""
    Lq, bz, E = query.shape
    dh = E // nhead
    h = jnp.transpose(query, (1, 0, 2))
    mask = _construct_graph_mask(reference, h)
    mask = jnp.broadcast_to(mask[:, None], (bz, nhead, Lq, Lq)).reshape(bz * nhead, Lq, Lq)

    def proj(w, b):
        y = jnp.einsum("ble,oe->blo", h, w) + b
        return (y.reshape(bz, Lq, nhead, dh).transpose(0, 2, 1, 3)
                 .reshape(bz * nhead, Lq, dh))

    Q = proj(params["wq"], params["bq"])
    K = proj(params["wk"], params["bk"])
    V = proj(params["wv"], params["bv"])
    attn = jnp.einsum("bqd,bkd->bqk", Q, K) / math.sqrt(dh)
    attn = jnp.where(mask, -jnp.inf, attn)
    attn = jax.nn.softmax(attn, axis=-1)
    hr = jnp.einsum("bqk,bkd->bqd", attn, V)
    hr = hr.reshape(bz, nhead, Lq, dh).transpose(0, 2, 1, 3).reshape(bz, Lq, E) + h
    return jnp.transpose(hr, (1, 0, 2))


def init_params(key, embed_dim):
    bound = 1.0 / math.sqrt(embed_dim)
    keys = jax.random.split(key, 6)
    u = lambda k, shape: jax.random.uniform(k, shape, jnp.float32, -bound, bound)
    return {
        "wq": u(keys[0], (embed_dim, embed_dim)), "bq": u(keys[1], (embed_dim,)),
        "wk": u(keys[2], (embed_dim, embed_dim)), "bk": u(keys[3], (embed_dim,)),
        "wv": u(keys[4], (embed_dim, embed_dim)), "bv": u(keys[5], (embed_dim,)),
    }


if __name__ == "__main__":
    Lq, bz, E, nhead = 8, 2, 32, 4
    root = jax.random.PRNGKey(0)
    k_q, k_mid, k_len, k_par = jax.random.split(root, 4)

    query = jax.random.normal(k_q, (Lq, bz, E), dtype=jnp.float32)
    # segments as (midpoint, length) in [0, 1]
    mids = jax.random.uniform(k_mid, (bz, Lq, 1), minval=0.2, maxval=0.8)
    lens = jax.random.uniform(k_len, (bz, Lq, 1), minval=0.1, maxval=0.4)
    reference = jnp.concatenate([mids, lens], axis=-1)               # (bz, Lq, 2)
    params = init_params(k_par, E)

    ref = _reference_forward(query, reference, params, nhead)

    # f32 MXU-operand path: tight tolerance.
    out_f32 = relation_attention(query, reference, params, nhead,
                                 compute_dtype=jnp.float32)
    out_f32 = jax.block_until_ready(out_f32)
    assert out_f32.shape == (Lq, bz, E)
    assert jnp.allclose(out_f32, ref, atol=5e-3, rtol=5e-3), "f32 mismatch vs reference"

    # bf16 MXU-operand path (default, best MXU throughput on v5e/v6e/v7x).
    out_bf16 = relation_attention(query, reference, params, nhead,
                                  compute_dtype=jnp.bfloat16)
    out_bf16 = jax.block_until_ready(out_bf16)
    assert out_bf16.shape == (Lq, bz, E)
    assert jnp.allclose(out_bf16, ref, atol=5e-2, rtol=5e-2), "bf16 mismatch vs reference"

    print("KERNEL_OK")
</pallas_src>

<mosaic_0001>
module attributes {stable_mosaic.version = 11 : i64} {
  func.func @_relation_attention_kernel(%arg0: i32, %arg1: memref<2x8x8xbf16, #tpu.memory_space<vmem>>, %arg2: memref<2x8x32xf32, #tpu.memory_space<vmem>>, %arg3: memref<32x96xf32, #tpu.memory_space<vmem>>, %arg4: memref<1x96xf32, #tpu.memory_space<vmem>>, %arg5: memref<2x8x32xf32, #tpu.memory_space<vmem>>) attributes {dimension_semantics = [#tpu.dimension_semantics<parallel>], iteration_bounds = array<i64: 1>, scalar_prefetch = 0 : i64, scratch_operands = 0 : i64, tpu.core_type = #tpu.core_type<tc>, window_params = [{transform_indices = @transform_0, window_bounds = array<i64: 2, 8, 8>}, {transform_indices = @transform_1, window_bounds = array<i64: 2, 8, 32>}, {pipeline_mode = #tpu.pipeline_mode<synchronous>, transform_indices = @transform_2, window_bounds = array<i64: 32, 96>}, {pipeline_mode = #tpu.pipeline_mode<synchronous>, transform_indices = @transform_3, window_bounds = array<i64: 1, 96>}, {transform_indices = @transform_4, window_bounds = array<i64: 2, 8, 32>}]} {
    %c0 = arith.constant 0 : index
    %c0_0 = arith.constant 0 : index
    %0 = vector.load %arg3[%c0, %c0_0] : memref<32x96xf32, #tpu.memory_space<vmem>>, vector<32x96xf32>
    %c0_1 = arith.constant 0 : index
    %c0_2 = arith.constant 0 : index
    %1 = vector.load %arg4[%c0_1, %c0_2] : memref<1x96xf32, #tpu.memory_space<vmem>>, vector<1x96xf32>
    %c0_3 = arith.constant 0 : index
    %c0_4 = arith.constant 0 : index
    %c0_5 = arith.constant 0 : index
    %2 = vector.load %arg2[%c0_3, %c0_4, %c0_5] : memref<2x8x32xf32, #tpu.memory_space<vmem>>, vector<1x8x32xf32>
    %3 = vector.shape_cast %2 : vector<1x8x32xf32> to vector<8x32xf32>
    %cst = arith.constant dense<0.000000e+00> : vector<8x96xf32>
    %4 = tpu.matmul %3, %0, %cst {dimension_numbers = #tpu.dot_dimension_numbers<[1], [0], [0], [1], [0, 0, 1, 1], [], []>} : vector<8x32xf32>, vector<32x96xf32>, vector<8x96xf32> -> vector<8x96xf32>
    %5 = vector.broadcast %1 : vector<1x96xf32> to vector<8x96xf32>
    %6 = arith.addf %4, %5 : vector<8x96xf32>
    %c0_6 = arith.constant 0 : index
    %c0_7 = arith.constant 0 : index
    %c0_8 = arith.constant 0 : index
    %7 = vector.load %arg1[%c0_6, %c0_7, %c0_8] : memref<2x8x8xbf16, #tpu.memory_space<vmem>>, vector<1x8x8xbf16>
    %8 = vector.shape_cast %7 : vector<1x8x8xbf16> to vector<8x8xbf16>
    %9 = arith.extf %8 : vector<8x8xbf16> to vector<8x8xf32>
    %10 = vector.extract_strided_slice %6 {offsets = [0, 0], sizes = [8, 8], strides = [1, 1]} : vector<8x96xf32> to vector<8x8xf32>
    %cst_9 = arith.constant 0.353553385 : f32
    %11 = vector.broadcast %cst_9 : f32 to vector<8x8xf32>
    %12 = arith.mulf %10, %11 : vector<8x8xf32>
    %13 = vector.extract_strided_slice %6 {offsets = [0, 32], sizes = [8, 8], strides = [1, 1]} : vector<8x96xf32> to vector<8x8xf32>
    %14 = vector.extract_strided_slice %6 {offsets = [0, 64], sizes = [8, 8], strides = [1, 1]} : vector<8x96xf32> to vector<8x8xf32>
    %cst_10 = arith.constant dense<0.000000e+00> : vector<8x8xf32>
    %15 = tpu.matmul %12, %13, %cst_10 {dimension_numbers = #tpu.dot_dimension_numbers<[1], [1], [0], [0], [0, 0, 1, 0], [], []>} : vector<8x8xf32>, vector<8x8xf32>, vector<8x8xf32> -> vector<8x8xf32>
    %16 = arith.addf %15, %9 : vector<8x8xf32>
    %cst_11 = arith.constant dense<0xFF800000> : vector<8xf32>
    %17 = vector.multi_reduction <maximumf>, %16, %cst_11 [1] : vector<8x8xf32> to vector<8xf32>
    %18 = vector.shape_cast %17 : vector<8xf32> to vector<8x1xf32>
    %19 = vector.broadcast %18 : vector<8x1xf32> to vector<8x8xf32>
    %20 = arith.subf %16, %19 : vector<8x8xf32>
    %21 = math.exp %20 : vector<8x8xf32>
    %cst_12 = arith.constant dense<0.000000e+00> : vector<8xf32>
    %22 = vector.multi_reduction <add>, %21, %cst_12 [1] : vector<8x8xf32> to vector<8xf32>
    %23 = vector.shape_cast %22 : vector<8xf32> to vector<8x1xf32>
    %24 = tpu.reciprocal %23 {approx = true} : vector<8x1xf32> -> vector<8x1xf32>
    %25 = vector.broadcast %24 : vector<8x1xf32> to vector<8x8xf32>
    %26 = arith.mulf %21, %25 : vector<8x8xf32>
    %cst_13 = arith.constant dense<0.000000e+00> : vector<8x8xf32>
    %27 = tpu.matmul %26, %14, %cst_13 {dimension_numbers = #tpu.dot_dimension_numbers<[1], [0], [0], [1], [0, 0, 1, 1], [], []>} : vector<8x8xf32>, vector<8x8xf32>, vector<8x8xf32> -> vector<8x8xf32>
    %28 = vector.extract_strided_slice %6 {offsets = [0, 8], sizes = [8, 8], strides = [1, 1]} : vector<8x96xf32> to vector<8x8xf32>
    %cst_14 = arith.constant 0.353553385 : f32
    %29 = vector.broadcast %cst_14 : f32 to vector<8x8xf32>
    %30 = arith.mulf %28, %29 : vector<8x8xf32>
    %31 = vector.extract_strided_slice %6 {offsets = [0, 40], sizes = [8, 8], strides = [1, 1]} : vector<8x96xf32> to vector<8x8xf32>
    %32 = vector.extract_strided_slice %6 {offsets = [0, 72], sizes = [8, 8], strides = [1, 1]} : vector<8x96xf32> to vector<8x8xf32>
    %cst_15 = arith.constant dense<0.000000e+00> : vector<8x8xf32>
    %33 = tpu.matmul %30, %31, %cst_15 {dimension_numbers = #tpu.dot_dimension_numbers<[1], [1], [0], [0], [0, 0, 1, 0], [], []>} : vector<8x8xf32>, vector<8x8xf32>, vector<8x8xf32> -> vector<8x8xf32>
    %34 = arith.addf %33, %9 : vector<8x8xf32>
    %cst_16 = arith.constant dense<0xFF800000> : vector<8xf32>
    %35 = vector.multi_reduction <maximumf>, %34, %cst_16 [1] : vector<8x8xf32> to vector<8xf32>
    %36 = vector.shape_cast %35 : vector<8xf32> to vector<8x1xf32>
    %37 = vector.broadcast %36 : vector<8x1xf32> to vector<8x8xf32>
    %38 = arith.subf %34, %37 : vector<8x8xf32>
    %39 = math.exp %38 : vector<8x8xf32>
    %cst_17 = arith.constant dense<0.000000e+00> : vector<8xf32>
    %40 = vector.multi_reduction <add>, %39, %cst_17 [1] : vector<8x8xf32> to vector<8xf32>
    %41 = vector.shape_cast %40 : vector<8xf32> to vector<8x1xf32>
    %42 = tpu.reciprocal %41 {approx = true} : vector<8x1xf32> -> vector<8x1xf32>
    %43 = vector.broadcast %42 : vector<8x1xf32> to vector<8x8xf32>
    %44 = arith.mulf %39, %43 : vector<8x8xf32>
    %cst_18 = arith.constant dense<0.000000e+00> : vector<8x8xf32>
    %45 = tpu.matmul %44, %32, %cst_18 {dimension_numbers = #tpu.dot_dimension_numbers<[1], [0], [0], [1], [0, 0, 1, 1], [], []>} : vector<8x8xf32>, vector<8x8xf32>, vector<8x8xf32> -> vector<8x8xf32>
    %46 = vector.extract_strided_slice %6 {offsets = [0, 16], sizes = [8, 8], strides = [1, 1]} : vector<8x96xf32> to vector<8x8xf32>
    %cst_19 = arith.constant 0.353553385 : f32
    %47 = vector.broadcast %cst_19 : f32 to vector<8x8xf32>
    %48 = arith.mulf %46, %47 : vector<8x8xf32>
    %49 = vector.extract_strided_slice %6 {offsets = [0, 48], sizes = [8, 8], strides = [1, 1]} : vector<8x96xf32> to vector<8x8xf32>
    %50 = vector.extract_strided_slice %6 {offsets = [0, 80], sizes = [8, 8], strides = [1, 1]} : vector<8x96xf32> to vector<8x8xf32>
    %cst_20 = arith.constant dense<0.000000e+00> : vector<8x8xf32>
    %51 = tpu.matmul %48, %49, %cst_20 {dimension_numbers = #tpu.dot_dimension_numbers<[1], [1], [0], [0], [0, 0, 1, 0], [], []>} : vector<8x8xf32>, vector<8x8xf32>, vector<8x8xf32> -> vector<8x8xf32>
    %52 = arith.addf %51, %9 : vector<8x8xf32>
    %cst_21 = arith.constant dense<0xFF800000> : vector<8xf32>
    %53 = vector.multi_reduction <maximumf>, %52, %cst_21 [1] : vector<8x8xf32> to vector<8xf32>
    %54 = vector.shape_cast %53 : vector<8xf32> to vector<8x1xf32>
    %55 = vector.broadcast %54 : vector<8x1xf32> to vector<8x8xf32>
    %56 = arith.subf %52, %55 : vector<8x8xf32>
    %57 = math.exp %56 : vector<8x8xf32>
    %cst_22 = arith.constant dense<0.000000e+00> : vector<8xf32>
    %58 = vector.multi_reduction <add>, %57, %cst_22 [1] : vector<8x8xf32> to vector<8xf32>
    %59 = vector.shape_cast %58 : vector<8xf32> to vector<8x1xf32>
    %60 = tpu.reciprocal %59 {approx = true} : vector<8x1xf32> -> vector<8x1xf32>
    %61 = vector.broadcast %60 : vector<8x1xf32> to vector<8x8xf32>
    %62 = arith.mulf %57, %61 : vector<8x8xf32>
    %cst_23 = arith.constant dense<0.000000e+00> : vector<8x8xf32>
    %63 = tpu.matmul %62, %50, %cst_23 {dimension_numbers = #tpu.dot_dimension_numbers<[1], [0], [0], [1], [0, 0, 1, 1], [], []>} : vector<8x8xf32>, vector<8x8xf32>, vector<8x8xf32> -> vector<8x8xf32>
    %64 = vector.extract_strided_slice %6 {offsets = [0, 24], sizes = [8, 8], strides = [1, 1]} : vector<8x96xf32> to vector<8x8xf32>
    %cst_24 = arith.constant 0.353553385 : f32
    %65 = vector.broadcast %cst_24 : f32 to vector<8x8xf32>
    %66 = arith.mulf %64, %65 : vector<8x8xf32>
    %67 = vector.extract_strided_slice %6 {offsets = [0, 56], sizes = [8, 8], strides = [1, 1]} : vector<8x96xf32> to vector<8x8xf32>
    %68 = vector.extract_strided_slice %6 {offsets = [0, 88], sizes = [8, 8], strides = [1, 1]} : vector<8x96xf32> to vector<8x8xf32>
    %cst_25 = arith.constant dense<0.000000e+00> : vector<8x8xf32>
    %69 = tpu.matmul %66, %67, %cst_25 {dimension_numbers = #tpu.dot_dimension_numbers<[1], [1], [0], [0], [0, 0, 1, 0], [], []>} : vector<8x8xf32>, vector<8x8xf32>, vector<8x8xf32> -> vector<8x8xf32>
    %70 = arith.addf %69, %9 : vector<8x8xf32>
    %cst_26 = arith.constant dense<0xFF800000> : vector<8xf32>
    %71 = vector.multi_reduction <maximumf>, %70, %cst_26 [1] : vector<8x8xf32> to vector<8xf32>
    %72 = vector.shape_cast %71 : vector<8xf32> to vector<8x1xf32>
    %73 = vector.broadcast %72 : vector<8x1xf32> to vector<8x8xf32>
    %74 = arith.subf %70, %73 : vector<8x8xf32>
    %75 = math.exp %74 : vector<8x8xf32>
    %cst_27 = arith.constant dense<0.000000e+00> : vector<8xf32>
    %76 = vector.multi_reduction <add>, %75, %cst_27 [1] : vector<8x8xf32> to vector<8xf32>
    %77 = vector.shape_cast %76 : vector<8xf32> to vector<8x1xf32>
    %78 = tpu.reciprocal %77 {approx = true} : vector<8x1xf32> -> vector<8x1xf32>
    %79 = vector.broadcast %78 : vector<8x1xf32> to vector<8x8xf32>
    %80 = arith.mulf %75, %79 : vector<8x8xf32>
    %cst_28 = arith.constant dense<0.000000e+00> : vector<8x8xf32>
    %81 = tpu.matmul %80, %68, %cst_28 {dimension_numbers = #tpu.dot_dimension_numbers<[1], [0], [0], [1], [0, 0, 1, 1], [], []>} : vector<8x8xf32>, vector<8x8xf32>, vector<8x8xf32> -> vector<8x8xf32>
    %82 = tpu.concatenate %27, %45, %63, %81 in 1 : vector<8x8xf32>, vector<8x8xf32>, vector<8x8xf32>, vector<8x8xf32> -> vector<8x32xf32>
    %83 = arith.addf %82, %3 : vector<8x32xf32>
    %c0_29 = arith.constant 0 : index
    %c0_30 = arith.constant 0 : index
    %c0_31 = arith.constant 0 : index
    %84 = vector.load %arg5[%c0_29, %c0_30, %c0_31] : memref<2x8x32xf32, #tpu.memory_space<vmem>>, vector<1x8x32xf32>
    %85 = vector.shape_cast %84 : vector<1x8x32xf32> to vector<8x32xf32>
    %86 = vector.shape_cast %83 : vector<8x32xf32> to vector<1x8x32xf32>
    tpu.vector_store %arg5[%c0_29, %c0_30, %c0_31], %86 {strides = array<i32>} : memref<2x8x32xf32, #tpu.memory_space<vmem>>, vector<1x8x32xf32>,
    %c1 = arith.constant 1 : index
    %c0_32 = arith.constant 0 : index
    %c0_33 = arith.constant 0 : index
    %87 = vector.load %arg2[%c1, %c0_32, %c0_33] : memref<2x8x32xf32, #tpu.memory_space<vmem>>, vector<1x8x32xf32>
    %88 = vector.shape_cast %87 : vector<1x8x32xf32> to vector<8x32xf32>
    %cst_34 = arith.constant dense<0.000000e+00> : vector<8x96xf32>
    %89 = tpu.matmul %88, %0, %cst_34 {dimension_numbers = #tpu.dot_dimension_numbers<[1], [0], [0], [1], [0, 0, 1, 1], [], []>} : vector<8x32xf32>, vector<32x96xf32>, vector<8x96xf32> -> vector<8x96xf32>
    %90 = vector.broadcast %1 : vector<1x96xf32> to vector<8x96xf32>
    %91 = arith.addf %89, %90 : vector<8x96xf32>
    %c1_35 = arith.constant 1 : index
    %c0_36 = arith.constant 0 : index
    %c0_37 = arith.constant 0 : index
    %92 = vector.load %arg1[%c1_35, %c0_36, %c0_37] : memref<2x8x8xbf16, #tpu.memory_space<vmem>>, vector<1x8x8xbf16>
    %93 = vector.shape_cast %92 : vector<1x8x8xbf16> to vector<8x8xbf16>
    %94 = arith.extf %93 : vector<8x8xbf16> to vector<8x8xf32>
    %95 = vector.extract_strided_slice %91 {offsets = [0, 0], sizes = [8, 8], strides = [1, 1]} : vector<8x96xf32> to vector<8x8xf32>
    %cst_38 = arith.constant 0.353553385 : f32
    %96 = vector.broadcast %cst_38 : f32 to vector<8x8xf32>
    %97 = arith.mulf %95, %96 : vector<8x8xf32>
    %98 = vector.extract_strided_slice %91 {offsets = [0, 32], sizes = [8, 8], strides = [1, 1]} : vector<8x96xf32> to vector<8x8xf32>
    %99 = vector.extract_strided_slice %91 {offsets = [0, 64], sizes = [8, 8], strides = [1, 1]} : vector<8x96xf32> to vector<8x8xf32>
    %cst_39 = arith.constant dense<0.000000e+00> : vector<8x8xf32>
    %100 = tpu.matmul %97, %98, %cst_39 {dimension_numbers = #tpu.dot_dimension_numbers<[1], [1], [0], [0], [0, 0, 1, 0], [], []>} : vector<8x8xf32>, vector<8x8xf32>, vector<8x8xf32> -> vector<8x8xf32>
    %101 = arith.addf %100, %94 : vector<8x8xf32>
    %cst_40 = arith.constant dense<0xFF800000> : vector<8xf32>
    %102 = vector.multi_reduction <maximumf>, %101, %cst_40 [1] : vector<8x8xf32> to vector<8xf32>
    %103 = vector.shape_cast %102 : vector<8xf32> to vector<8x1xf32>
    %104 = vector.broadcast %103 : vector<8x1xf32> to vector<8x8xf32>
    %105 = arith.subf %101, %104 : vector<8x8xf32>
    %106 = math.exp %105 : vector<8x8xf32>
    %cst_41 = arith.constant dense<0.000000e+00> : vector<8xf32>
    %107 = vector.multi_reduction <add>, %106, %cst_41 [1] : vector<8x8xf32> to vector<8xf32>
    %108 = vector.shape_cast %107 : vector<8xf32> to vector<8x1xf32>
    %109 = tpu.reciprocal %108 {approx = true} : vector<8x1xf32> -> vector<8x1xf32>
    %110 = vector.broadcast %109 : vector<8x1xf32> to vector<8x8xf32>
    %111 = arith.mulf %106, %110 : vector<8x8xf32>
    %cst_42 = arith.constant dense<0.000000e+00> : vector<8x8xf32>
    %112 = tpu.matmul %111, %99, %cst_42 {dimension_numbers = #tpu.dot_dimension_numbers<[1], [0], [0], [1], [0, 0, 1, 1], [], []>} : vector<8x8xf32>, vector<8x8xf32>, vector<8x8xf32> -> vector<8x8xf32>
    %113 = vector.extract_strided_slice %91 {offsets = [0, 8], sizes = [8, 8], strides = [1, 1]} : vector<8x96xf32> to vector<8x8xf32>
    %cst_43 = arith.constant 0.353553385 : f32
    %114 = vector.broadcast %cst_43 : f32 to vector<8x8xf32>
    %115 = arith.mulf %113, %114 : vector<8x8xf32>
    %116 = vector.extract_strided_slice %91 {offsets = [0, 40], sizes = [8, 8], strides = [1, 1]} : vector<8x96xf32> to vector<8x8xf32>
    %117 = vector.extract_strided_slice %91 {offsets = [0, 72], sizes = [8, 8], strides = [1, 1]} : vector<8x96xf32> to vector<8x8xf32>
    %cst_44 = arith.constant dense<0.000000e+00> : vector<8x8xf32>
    %118 = tpu.matmul %115, %116, %cst_44 {dimension_numbers = #tpu.dot_dimension_numbers<[1], [1], [0], [0], [0, 0, 1, 0], [], []>} : vector<8x8xf32>, vector<8x8xf32>, vector<8x8xf32> -> vector<8x8xf32>
    %119 = arith.addf %118, %94 : vector<8x8xf32>
    %cst_45 = arith.constant dense<0xFF800000> : vector<8xf32>
    %120 = vector.multi_reduction <maximumf>, %119, %cst_45 [1] : vector<8x8xf32> to vector<8xf32>
    %121 = vector.shape_cast %120 : vector<8xf32> to vector<8x1xf32>
    %122 = vector.broadcast %121 : vector<8x1xf32> to vector<8x8xf32>
    %123 = arith.subf %119, %122 : vector<8x8xf32>
    %124 = math.exp %123 : vector<8x8xf32>
    %cst_46 = arith.constant dense<0.000000e+00> : vector<8xf32>
    %125 = vector.multi_reduction <add>, %124, %cst_46 [1] : vector<8x8xf32> to vector<8xf32>
    %126 = vector.shape_cast %125 : vector<8xf32> to vector<8x1xf32>
    %127 = tpu.reciprocal %126 {approx = true} : vector<8x1xf32> -> vector<8x1xf32>
    %128 = vector.broadcast %127 : vector<8x1xf32> to vector<8x8xf32>
    %129 = arith.mulf %124, %128 : vector<8x8xf32>
    %cst_47 = arith.constant dense<0.000000e+00> : vector<8x8xf32>
    %130 = tpu.matmul %129, %117, %cst_47 {dimension_numbers = #tpu.dot_dimension_numbers<[1], [0], [0], [1], [0, 0, 1, 1], [], []>} : vector<8x8xf32>, vector<8x8xf32>, vector<8x8xf32> -> vector<8x8xf32>
    %131 = vector.extract_strided_slice %91 {offsets = [0, 16], sizes = [8, 8], strides = [1, 1]} : vector<8x96xf32> to vector<8x8xf32>
    %cst_48 = arith.constant 0.353553385 : f32
    %132 = vector.broadcast %cst_48 : f32 to vector<8x8xf32>
    %133 = arith.mulf %131, %132 : vector<8x8xf32>
    %134 = vector.extract_strided_slice %91 {offsets = [0, 48], sizes = [8, 8], strides = [1, 1]} : vector<8x96xf32> to vector<8x8xf32>
    %135 = vector.extract_strided_slice %91 {offsets = [0, 80], sizes = [8, 8], strides = [1, 1]} : vector<8x96xf32> to vector<8x8xf32>
    %cst_49 = arith.constant dense<0.000000e+00> : vector<8x8xf32>
    %136 = tpu.matmul %133, %134, %cst_49 {dimension_numbers = #tpu.dot_dimension_numbers<[1], [1], [0], [0], [0, 0, 1, 0], [], []>} : vector<8x8xf32>, vector<8x8xf32>, vector<8x8xf32> -> vector<8x8xf32>
    %137 = arith.addf %136, %94 : vector<8x8xf32>
    %cst_50 = arith.constant dense<0xFF800000> : vector<8xf32>
    %138 = vector.multi_reduction <maximumf>, %137, %cst_50 [1] : vector<8x8xf32> to vector<8xf32>
    %139 = vector.shape_cast %138 : vector<8xf32> to vector<8x1xf32>
    %140 = vector.broadcast %139 : vector<8x1xf32> to vector<8x8xf32>
    %141 = arith.subf %137, %140 : vector<8x8xf32>
    %142 = math.exp %141 : vector<8x8xf32>
    %cst_51 = arith.constant dense<0.000000e+00> : vector<8xf32>
    %143 = vector.multi_reduction <add>, %142, %cst_51 [1] : vector<8x8xf32> to vector<8xf32>
    %144 = vector.shape_cast %143 : vector<8xf32> to vector<8x1xf32>
    %145 = tpu.reciprocal %144 {approx = true} : vector<8x1xf32> -> vector<8x1xf32>
    %146 = vector.broadcast %145 : vector<8x1xf32> to vector<8x8xf32>
    %147 = arith.mulf %142, %146 : vector<8x8xf32>
    %cst_52 = arith.constant dense<0.000000e+00> : vector<8x8xf32>
    %148 = tpu.matmul %147, %135, %cst_52 {dimension_numbers = #tpu.dot_dimension_numbers<[1], [0], [0], [1], [0, 0, 1, 1], [], []>} : vector<8x8xf32>, vector<8x8xf32>, vector<8x8xf32> -> vector<8x8xf32>
    %149 = vector.extract_strided_slice %91 {offsets = [0, 24], sizes = [8, 8], strides = [1, 1]} : vector<8x96xf32> to vector<8x8xf32>
    %cst_53 = arith.constant 0.353553385 : f32
    %150 = vector.broadcast %cst_53 : f32 to vector<8x8xf32>
    %151 = arith.mulf %149, %150 : vector<8x8xf32>
    %152 = vector.extract_strided_slice %91 {offsets = [0, 56], sizes = [8, 8], strides = [1, 1]} : vector<8x96xf32> to vector<8x8xf32>
    %153 = vector.extract_strided_slice %91 {offsets = [0, 88], sizes = [8, 8], strides = [1, 1]} : vector<8x96xf32> to vector<8x8xf32>
    %cst_54 = arith.constant dense<0.000000e+00> : vector<8x8xf32>
    %154 = tpu.matmul %151, %152, %cst_54 {dimension_numbers = #tpu.dot_dimension_numbers<[1], [1], [0], [0], [0, 0, 1, 0], [], []>} : vector<8x8xf32>, vector<8x8xf32>, vector<8x8xf32> -> vector<8x8xf32>
    %155 = arith.addf %154, %94 : vector<8x8xf32>
    %cst_55 = arith.constant dense<0xFF800000> : vector<8xf32>
    %156 = vector.multi_reduction <maximumf>, %155, %cst_55 [1] : vector<8x8xf32> to vector<8xf32>
    %157 = vector.shape_cast %156 : vector<8xf32> to vector<8x1xf32>
    %158 = vector.broadcast %157 : vector<8x1xf32> to vector<8x8xf32>
    %159 = arith.subf %155, %158 : vector<8x8xf32>
    %160 = math.exp %159 : vector<8x8xf32>
    %cst_56 = arith.constant dense<0.000000e+00> : vector<8xf32>
    %161 = vector.multi_reduction <add>, %160, %cst_56 [1] : vector<8x8xf32> to vector<8xf32>
    %162 = vector.shape_cast %161 : vector<8xf32> to vector<8x1xf32>
    %163 = tpu.reciprocal %162 {approx = true} : vector<8x1xf32> -> vector<8x1xf32>
    %164 = vector.broadcast %163 : vector<8x1xf32> to vector<8x8xf32>
    %165 = arith.mulf %160, %164 : vector<8x8xf32>
    %cst_57 = arith.constant dense<0.000000e+00> : vector<8x8xf32>
    %166 = tpu.matmul %165, %153, %cst_57 {dimension_numbers = #tpu.dot_dimension_numbers<[1], [0], [0], [1], [0, 0, 1, 1], [], []>} : vector<8x8xf32>, vector<8x8xf32>, vector<8x8xf32> -> vector<8x8xf32>
    %167 = tpu.concatenate %112, %130, %148, %166 in 1 : vector<8x8xf32>, vector<8x8xf32>, vector<8x8xf32>, vector<8x8xf32> -> vector<8x32xf32>
    %168 = arith.addf %167, %88 : vector<8x32xf32>
    %c1_58 = arith.constant 1 : index
    %c0_59 = arith.constant 0 : index
    %c0_60 = arith.constant 0 : index
    %169 = vector.load %arg5[%c1_58, %c0_59, %c0_60] : memref<2x8x32xf32, #tpu.memory_space<vmem>>, vector<1x8x32xf32>
    %170 = vector.shape_cast %169 : vector<1x8x32xf32> to vector<8x32xf32>
    %171 = vector.shape_cast %168 : vector<8x32xf32> to vector<1x8x32xf32>
    tpu.vector_store %arg5[%c1_58, %c0_59, %c0_60], %171 {strides = array<i32>} : memref<2x8x32xf32, #tpu.memory_space<vmem>>, vector<1x8x32xf32>,
    return
  }
  func.func @transform_0(%arg0: i32) -> (i32, i32, i32) {
    %c0_i32 = arith.constant 0 : i32
    %c0_i32_0 = arith.constant 0 : i32
    %c0_i32_1 = arith.constant 0 : i32
    return %arg0, %c0_i32, %c0_i32_0 : i32, i32, i32
  }
  func.func @transform_1(%arg0: i32) -> (i32, i32, i32) {
    %c0_i32 = arith.constant 0 : i32
    %c0_i32_0 = arith.constant 0 : i32
    %c0_i32_1 = arith.constant 0 : i32
    return %arg0, %c0_i32, %c0_i32_0 : i32, i32, i32
  }
  func.func @transform_2(%arg0: i32) -> (i32, i32) {
    %c0_i32 = arith.constant 0 : i32
    %c0_i32_0 = arith.constant 0 : i32
    %c0_i32_1 = arith.constant 0 : i32
    return %c0_i32, %c0_i32_0 : i32, i32
  }
  func.func @transform_3(%arg0: i32) -> (i32, i32) {
    %c0_i32 = arith.constant 0 : i32
    %c0_i32_0 = arith.constant 0 : i32
    %c0_i32_1 = arith.constant 0 : i32
    return %c0_i32, %c0_i32_0 : i32, i32
  }
  func.func @transform_4(%arg0: i32) -> (i32, i32, i32) {
    %c0_i32 = arith.constant 0 : i32
    %c0_i32_0 = arith.constant 0 : i32
    %c0_i32_1 = arith.constant 0 : i32
    return %arg0, %c0_i32, %c0_i32_0 : i32, i32, i32
  }
}

</mosaic_0001>

<llo_original>
// kernel: tpu_custom_call.1
$region0: #{tpu_custom_call.1}
  #allocation0 [shape = 'u32[]', space=smem, size = 0x4, offset = 0x4, fixed_abs, tag = 'smem constant byte address 0x4 - core index']
  #allocation1 [shape = 'u32[144,128]{1,0:T(1,128)}', space=vmem, size = 0x12000, scoped, tag = 'internal scratch']
  %s0 = inlined_call_operand.hbm [shape: bf16[2,8,8], index: 0, kind: input, shape index: {}]
  %s1 = inlined_call_operand.hbm [shape: f32[2,8,32], index: 1, kind: input, shape index: {}]
  %s2 = inlined_call_operand.hbm [shape: f32[32,96], index: 2, kind: input, shape index: {}]
  %s3 = inlined_call_operand.vmem [shape: f32[1,96], index: 3, kind: input, shape index: {}]
  %s4 = inlined_call_operand.hbm [shape: f32[2,8,32], index: 4, kind: output, shape index: {}]
  %s5 = sld [smem:[#allocation0]]
  $region38: #{tpu_custom_call.1} parent=0
    _
  %s7 = ssub.s32 1, %s5
  %s8 = scalar_select 0, %s7, %s5
  $region1: #{tpu_custom_call.1} parent=0
    #allocation2 [shape = 'u8[4096]{0}', space=vmem, size = 0x1000, scoped, tag = 'input window, operand 0, single buffered']
    #allocation3 [shape = 's32[1]{0}', space=sflag, size = 0x4, scoped, tag = 'scoped memory for tpu_custom_call.1']
    #allocation4 [shape = 's32[1]{0}', space=sflag, size = 0x4, scoped, tag = 'scoped memory for tpu_custom_call.1']
    #allocation5 [shape = 'u8[8192]{0}', space=vmem, size = 0x2000, scoped, tag = 'input window, operand 1, single buffered']
    #allocation6 [shape = 's32[1]{0}', space=sflag, size = 0x4, scoped, tag = 'scoped memory for tpu_custom_call.1']
    #allocation7 [shape = 'u8[16384]{0}', space=vmem, size = 0x4000, scoped, tag = 'input window, operand 2, single buffered']
    #allocation8 [shape = 'u8[8192]{0}', space=vmem, size = 0x2000, scoped, tag = 'output window, operand 0, single buffered']
    %9 = vsyncpa [#allocation3], 0
    %10 = vsyncpa [#allocation6], 0
    %11 = vsyncpa [#allocation4], 0
    // Predicated region
    $region2: #{tpu_custom_call.1} parent=1 // pred_check
      _
    $region3: #{tpu_custom_call.1} parent=1 // pred_check_branch
      %13 = sbr.rel (0) target = $region5
    $region4: #{tpu_custom_call.1} parent=1 // pred_region
      %s15 = ssub.s32 128, 128
      %16 = vsyncadd [#allocation3], %s15
      %s17 = sshll.u32 [#allocation2], 4
      %s18 = int_to_ptr.vmem [resolvable:$true] %s17
      %23 = dma.hbm_to_vmem [thread:$0]  %s0, 128, %s18, [#allocation3], 64, 64, 4
    $region5: #{tpu_custom_call.1} parent=1 // pred_fallthru
      _
    // Predicated region
    $region6: #{tpu_custom_call.1} parent=1 // pred_check
      _
    $region7: #{tpu_custom_call.1} parent=1 // pred_check_branch
      %25 = sbr.rel (0) target = $region9
    $region8: #{tpu_custom_call.1} parent=1 // pred_region
      %s27 = ssub.s32 256, 256
      %28 = vsyncadd [#allocation6], %s27
      %s29 = sshll.u32 [#allocation5], 4
      %s30 = int_to_ptr.vmem [resolvable:$true] %s29
      %35 = dma.hbm_to_vmem [thread:$0]  %s1, 256, %s30, [#allocation6], 128, 128, 8
    $region9: #{tpu_custom_call.1} parent=1 // pred_fallthru
      _
    // Predicated region
    $region10: #{tpu_custom_call.1} parent=1 // pred_check
      _
    $region11: #{tpu_custom_call.1} parent=1 // pred_check_branch
      %37 = sbr.rel (0) target = $region13
    $region12: #{tpu_custom_call.1} parent=1 // pred_region
      %s39 = ssub.s32 512, 512
      %40 = vsyncadd [#allocation6], %s39
      %s41 = sshll.u32 [#allocation7], 4
      %s42 = int_to_ptr.vmem [resolvable:$true] %s41
      %47 = dma.hbm_to_vmem [thread:$0]  %s2, 512, %s42, [#allocation6], 128, 128, 8
    $region13: #{tpu_custom_call.1} parent=1 // pred_fallthru
      _
    // Predicated region
    $region14: #{tpu_custom_call.1} parent=1 // pred_check
      _
    $region15: #{tpu_custom_call.1} parent=1 // pred_check_branch
      %49 = sbr.rel (0) target = $region17
    $region16: #{tpu_custom_call.1} parent=1 // pred_region
      _
    $region17: #{tpu_custom_call.1} parent=1 // pred_fallthru
      _
    // Predicated region
    $region18: #{tpu_custom_call.1} parent=1 // pred_check
      _
    $region19: #{tpu_custom_call.1} parent=1 // pred_check_branch
      %51 = sbr.rel (0) target = $region21
    $region20: #{tpu_custom_call.1} parent=1 // pred_region
      %52 = dma.done [#allocation3], 128
    $region21: #{tpu_custom_call.1} parent=1 // pred_fallthru
      _
    // Predicated region
    $region22: #{tpu_custom_call.1} parent=1 // pred_check
      _
    $region23: #{tpu_custom_call.1} parent=1 // pred_check_branch
      %54 = sbr.rel (0) target = $region25
    $region24: #{tpu_custom_call.1} parent=1 // pred_region
      %55 = dma.done [#allocation6], 256
    $region25: #{tpu_custom_call.1} parent=1 // pred_fallthru
      _
    // Predicated region
    $region26: #{tpu_custom_call.1} parent=1 // pred_check
      _
    $region27: #{tpu_custom_call.1} parent=1 // pred_check_branch
      %57 = sbr.rel (0) target = $region29
    $region28: #{tpu_custom_call.1} parent=1 // pred_region
      %58 = dma.done [#allocation6], 512
    $region29: #{tpu_custom_call.1} parent=1 // pred_fallthru
      _
    %v59 = vld [vmem:[#allocation7] sm:$0xff]
    %v60 = vld [vmem:[#allocation7 + $0x8] sm:$0xff]
    %v61 = vld [vmem:[#allocation7 + $0x10] sm:$0xff]
    %v62 = vld [vmem:[#allocation7 + $0x18] sm:$0xff]
    %v63 = vld [vmem:[%s3] sm:$0x1]
    %v64 = vld [vmem:[#allocation5] sm:$0xff]
    %v66 = vlaneseq
    %v67 = vshrl.u32 %v66, 7
    %v68 = vsub.s32 0, %v67
    %v69 = vrot.slane %v63, %v68
    %vm71 = vcmask 261120
    %v73 = vsel %vm71, %v64, 0
    %75 = vmatprep.subr.mxu0 0.0
    %76 = vmatpush1.msra.mxu0 0.0
    %77 = vmatprep.subr.mxu0 0.0
    %78 = vmatpush1.msra.mxu0 0.0
    %79 = vmatprep.subr.mxu0 0.0
    %80 = vmatpush1.msra.mxu0 0.0
    %81 = vmatprep.subr.mxu0 0.0
    %82 = vmatpush1.msra.mxu0 0.0
    %83 = vmatprep.subr.mxu0 0.0
    %84 = vmatpush1.msra.mxu0 0.0
    %85 = vmatprep.subr.mxu0 0.0
    %86 = vmatpush1.msra.mxu0 0.0
    %87 = vmatprep.subr.mxu0 0.0
    %88 = vmatpush1.msra.mxu0 0.0
    %89 = vmatprep.subr.mxu0 0.0
    %90 = vmatpush1.msra.mxu0 0.0
    %91 = vmatprep.subr.mxu0 0.0
    %92 = vmatpush1.msra.mxu0 0.0
    %93 = vmatprep.subr.mxu0 0.0
    %94 = vmatpush1.msra.mxu0 0.0
    %95 = vmatprep.subr.mxu0 0.0
    %96 = vmatpush1.msra.mxu0 0.0
    %97 = vmatprep.subr.mxu0 0.0
    %98 = vmatpush1.msra.mxu0 0.0
    %99 = vmatprep.subr.mxu0 0.0
    %100 = vmatpush1.msra.mxu0 %v62
    %101 = vmatprep.subr.mxu0 0.0
    %102 = vmatpush1.msra.mxu0 %v61
    %103 = vmatprep.subr.mxu0 0.0
    %104 = vmatpush1.msra.mxu0 %v60
    %105 = vmatprep.subr.mxu0 0.0
    %106 = vmatpush1.msra.mxu0 %v59
    %107 = vmatprep.subr.mxu0 0.0
    %108 = vmatpush2.msra.mxu0 0.0
    %109 = vmatprep.subr.mxu0 0.0
    %110 = vmatpush2.msra.mxu0 0.0
    %111 = vmatprep.subr.mxu0 0.0
    %112 = vmatpush2.msra.mxu0 0.0
    %113 = vmatprep.subr.mxu0 0.0
    %114 = vmatpush2.msra.mxu0 0.0
    %115 = vmatprep.subr.mxu0 0.0
    %116 = vmatpush2.msra.mxu0 0.0
    %117 = vmatprep.subr.mxu0 0.0
    %118 = vmatpush2.msra.mxu0 0.0
    %119 = vmatprep.subr.mxu0 0.0
    %120 = vmatpush2.msra.mxu0 0.0
    %121 = vmatprep.subr.mxu0 0.0
    %122 = vmatpush2.msra.mxu0 0.0
    %123 = vmatprep.subr.mxu0 0.0
    %124 = vmatpush2.msra.mxu0 0.0
    %125 = vmatprep.subr.mxu0 0.0
    %126 = vmatpush2.msra.mxu0 0.0
    %127 = vmatprep.subr.mxu0 0.0
    %128 = vmatpush2.msra.mxu0 0.0
    %129 = vmatprep.subr.mxu0 0.0
    %130 = vmatpush2.msra.mxu0 0.0
    %131 = vmatprep.subr.mxu0 0.0
    %132 = vmatpush2.msra.mxu0 0.0
    %133 = vmatprep.subr.mxu0 0.0
    %134 = vmatpush2.msra.mxu0 0.0
    %135 = vmatprep.subr.mxu0 0.0
    %136 = vmatpush2.msra.mxu0 0.0
    %137 = vmatprep.subr.mxu0 0.0
    %138 = vmatpush2.msra.mxu0 0.0
    %139 = vmatprep.mubr.f32.mxu0 0.0
    %140 = vmatmul.mubr.f32.gmra.mxu0 %v73
    %v141 = vpop.f32.mrf.mxu0
    %v142 = vadd.f32 %v69, %v141
    %v143 = vpop.f32.mrf.mxu0
    %144 = vdwg.mxu0
    %v145 = vld [vmem:[#allocation2] sm:$0xf]
    %v146 = vunpack.c.l.bf16 %v145
    %v147 = vmul.f32 %v142, 0.35355338
    %149 = vrot.lane.b32.xlu0 %v142, 96
    %v150 = vpop.permute.xlu0 %149
    %vm151 = vcmask 64512
    %v153 = vsel %vm151, %v147, 0
    %v155 = vsel %vm151, %v150, 0
    %157 = vmatprep.subr.mxu0 0.0
    %158 = vmatpush1.xpose.msra.mxu0 0.0
    %159 = vmatprep.subr.mxu0 0.0
    %160 = vmatpush1.xpose.msra.mxu0 0.0
    %161 = vmatprep.subr.mxu0 0.0
    %162 = vmatpush1.xpose.msra.mxu0 0.0
    %163 = vmatprep.subr.mxu0 0.0
    %164 = vmatpush1.xpose.msra.mxu0 0.0
    %165 = vmatprep.subr.mxu0 0.0
    %166 = vmatpush1.xpose.msra.mxu0 0.0
    %167 = vmatprep.subr.mxu0 0.0
    %168 = vmatpush1.xpose.msra.mxu0 0.0
    %169 = vmatprep.subr.mxu0 0.0
    %170 = vmatpush1.xpose.msra.mxu0 0.0
    %171 = vmatprep.subr.mxu0 0.0
    %172 = vmatpush1.xpose.msra.mxu0 0.0
    %173 = vmatprep.subr.mxu0 0.0
    %174 = vmatpush1.xpose.msra.mxu0 0.0
    %175 = vmatprep.subr.mxu0 0.0
    %176 = vmatpush1.xpose.msra.mxu0 0.0
    %177 = vmatprep.subr.mxu0 0.0
    %178 = vmatpush1.xpose.msra.mxu0 0.0
    %179 = vmatprep.subr.mxu0 0.0
    %180 = vmatpush1.xpose.msra.mxu0 0.0
    %181 = vmatprep.subr.mxu0 0.0
    %182 = vmatpush1.xpose.msra.mxu0 0.0
    %183 = vmatprep.subr.mxu0 0.0
    %184 = vmatpush1.xpose.msra.mxu0 0.0
    %185 = vmatprep.subr.mxu0 0.0
    %186 = vmatpush1.xpose.msra.mxu0 0.0
    %187 = vmatprep.subr.mxu0 0.0
    %188 = vmatpush1.xpose.msra.mxu0 %v155
    %189 = vmatprep.subr.mxu0 0.0
    %190 = vmatpush2.xpose.msra.mxu0 0.0
    %191 = vmatprep.subr.mxu0 0.0
    %192 = vmatpush2.xpose.msra.mxu0 0.0
    %193 = vmatprep.subr.mxu0 0.0
    %194 = vmatpush2.xpose.msra.mxu0 0.0
    %195 = vmatprep.subr.mxu0 0.0
    %196 = vmatpush2.xpose.msra.mxu0 0.0
    %197 = vmatprep.subr.mxu0 0.0
    %198 = vmatpush2.xpose.msra.mxu0 0.0
    %199 = vmatprep.subr.mxu0 0.0
    %200 = vmatpush2.xpose.msra.mxu0 0.0
    %201 = vmatprep.subr.mxu0 0.0
    %202 = vmatpush2.xpose.msra.mxu0 0.0
    %203 = vmatprep.subr.mxu0 0.0
    %204 = vmatpush2.xpose.msra.mxu0 0.0
    %205 = vmatprep.subr.mxu0 0.0
    %206 = vmatpush2.xpose.msra.mxu0 0.0
    %207 = vmatprep.subr.mxu0 0.0
    %208 = vmatpush2.xpose.msra.mxu0 0.0
    %209 = vmatprep.subr.mxu0 0.0
    %210 = vmatpush2.xpose.msra.mxu0 0.0
    %211 = vmatprep.subr.mxu0 0.0
    %212 = vmatpush2.xpose.msra.mxu0 0.0
    %213 = vmatprep.subr.mxu0 0.0
    %214 = vmatpush2.xpose.msra.mxu0 0.0
    %215 = vmatprep.subr.mxu0 0.0
    %216 = vmatpush2.xpose.msra.mxu0 0.0
    %217 = vmatprep.subr.mxu0 0.0
    %218 = vmatpush2.xpose.msra.mxu0 0.0
    %219 = vmatprep.subr.mxu0 0.0
    %220 = vmatpush2.xpose.msra.mxu0 0.0
    %221 = vmatprep.mubr.f32.mxu0 0.0
    %222 = vmatmul.mubr.f32.gmra.mxu0 %v153
    %v223 = vpop.f32.mrf.mxu0
    %v224 = vadd.f32 %v146, %v223
    %v225 = vpop.f32.mrf.mxu0
    %226 = vdwg.mxu0
    %v227 = vsel %vm151, %v224, -inf
    %228 = vmax.xlane.f32.xlu0 %v227
    %v229 = vpop.xlane.xlu0 %228
    %v230 = vsub.f32 %v224, %v229
    %v231 = vmul.f32 %v230, 1.442695
    %v232 = vpow.pop %v231
    %v233 = vsel %vm151, %v232, 0.0
    %234 = vadd.xlane.f32.xlu0 %v233
    %v235 = vpop.xlane.xlu0 %234
    %v236 = vrcp.pop %v235
    %v237 = vmul.f32 %v232, %v236
    %238 = vrot.lane.b32.xlu0 %v142, 64
    %v239 = vpop.permute.xlu0 %238
    %v242 = vsel %vm151, %v237, 0
    %244 = vmatprep.subr.mxu0 0.0
    %245 = vmatpush1.msra.mxu0 0.0
    %246 = vmatprep.subr.mxu0 0.0
    %247 = vmatpush1.msra.mxu0 0.0
    %248 = vmatprep.subr.mxu0 0.0
    %249 = vmatpush1.msra.mxu0 0.0
    %250 = vmatprep.subr.mxu0 0.0
    %251 = vmatpush1.msra.mxu0 0.0
    %252 = vmatprep.subr.mxu0 0.0
    %253 = vmatpush1.msra.mxu0 0.0
    %254 = vmatprep.subr.mxu0 0.0
    %255 = vmatpush1.msra.mxu0 0.0
    %256 = vmatprep.subr.mxu0 0.0
    %257 = vmatpush1.msra.mxu0 0.0
    %258 = vmatprep.subr.mxu0 0.0
    %259 = vmatpush1.msra.mxu0 0.0
    %260 = vmatprep.subr.mxu0 0.0
    %261 = vmatpush1.msra.mxu0 0.0
    %262 = vmatprep.subr.mxu0 0.0
    %263 = vmatpush1.msra.mxu0 0.0
    %264 = vmatprep.subr.mxu0 0.0
    %265 = vmatpush1.msra.mxu0 0.0
    %266 = vmatprep.subr.mxu0 0.0
    %267 = vmatpush1.msra.mxu0 0.0
    %268 = vmatprep.subr.mxu0 0.0
    %269 = vmatpush1.msra.mxu0 0.0
    %270 = vmatprep.subr.mxu0 0.0
    %271 = vmatpush1.msra.mxu0 0.0
    %272 = vmatprep.subr.mxu0 0.0
    %273 = vmatpush1.msra.mxu0 0.0
    %274 = vmatprep.subr.mxu0 0.0
    %275 = vmatpush1.msra.mxu0 %v239
    %276 = vmatprep.subr.mxu0 0.0
    %277 = vmatpush2.msra.mxu0 0.0
    %278 = vmatprep.subr.mxu0 0.0
    %279 = vmatpush2.msra.mxu0 0.0
    %280 = vmatprep.subr.mxu0 0.0
    %281 = vmatpush2.msra.mxu0 0.0
    %282 = vmatprep.subr.mxu0 0.0
    %283 = vmatpush2.msra.mxu0 0.0
    %284 = vmatprep.subr.mxu0 0.0
    %285 = vmatpush2.msra.mxu0 0.0
    %286 = vmatprep.subr.mxu0 0.0
    %287 = vmatpush2.msra.mxu0 0.0
    %288 = vmatprep.subr.mxu0 0.0
    %289 = vmatpush2.msra.mxu0 0.0
    %290 = vmatprep.subr.mxu0 0.0
    %291 = vmatpush2.msra.mxu0 0.0
    %292 = vmatprep.subr.mxu0 0.0
    %293 = vmatpush2.msra.mxu0 0.0
    %294 = vmatprep.subr.mxu0 0.0
    %295 = vmatpush2.msra.mxu0 0.0
    %296 = vmatprep.subr.mxu0 0.0
    %297 = vmatpush2.msra.mxu0 0.0
    %298 = vmatprep.subr.mxu0 0.0
    %299 = vmatpush2.msra.mxu0 0.0
    %300 = vmatprep.subr.mxu0 0.0
    %301 = vmatpush2.msra.mxu0 0.0
    %302 = vmatprep.subr.mxu0 0.0
    %303 = vmatpush2.msra.mxu0 0.0
    %304 = vmatprep.subr.mxu0 0.0
    %305 = vmatpush2.msra.mxu0 0.0
    %306 = vmatprep.subr.mxu0 0.0
    %307 = vmatpush2.msra.mxu0 0.0
    %308 = vmatprep.mubr.f32.mxu0 0.0
    %309 = vmatmul.mubr.f32.gmra.mxu0 %v242
    %v310 = vpop.f32.mrf.mxu0
    %v311 = vadd.f32 0.0, %v310
    %v312 = vpop.f32.mrf.mxu0
    %313 = vdwg.mxu0
    %314 = vrot.lane.b32.xlu0 %v147, 120
    %v315 = vpop.permute.xlu0 %314
    %316 = vrot.lane.b32.xlu0 %v142, 88
    %v317 = vpop.permute.xlu0 %316
    %v318 = vsel %vm151, %v315, 0
    %v320 = vsel %vm151, %v317, 0
    %322 = vmatprep.subr.mxu0 0.0
    %323 = vmatpush1.xpose.msra.mxu0 0.0
    %324 = vmatprep.subr.mxu0 0.0
    %325 = vmatpush1.xpose.msra.mxu0 0.0
    %326 = vmatprep.subr.mxu0 0.0
    %327 = vmatpush1.xpose.msra.mxu0 0.0
    %328 = vmatprep.subr.mxu0 0.0
    %329 = vmatpush1.xpose.msra.mxu0 0.0
    %330 = vmatprep.subr.mxu0 0.0
    %331 = vmatpush1.xpose.msra.mxu0 0.0
    %332 = vmatprep.subr.mxu0 0.0
    %333 = vmatpush1.xpose.msra.mxu0 0.0
    %334 = vmatprep.subr.mxu0 0.0
    %335 = vmatpush1.xpose.msra.mxu0 0.0
    %336 = vmatprep.subr.mxu0 0.0
    %337 = vmatpush1.xpose.msra.mxu0 0.0
    %338 = vmatprep.subr.mxu0 0.0
    %339 = vmatpush1.xpose.msra.mxu0 0.0
    %340 = vmatprep.subr.mxu0 0.0
    %341 = vmatpush1.xpose.msra.mxu0 0.0
    %342 = vmatprep.subr.mxu0 0.0
    %343 = vmatpush1.xpose.msra.mxu0 0.0
    %344 = vmatprep.subr.mxu0 0.0
    %345 = vmatpush1.xpose.msra.mxu0 0.0
    %346 = vmatprep.subr.mxu0 0.0
    %347 = vmatpush1.xpose.msra.mxu0 0.0
    %348 = vmatprep.subr.mxu0 0.0
    %349 = vmatpush1.xpose.msra.mxu0 0.0
    %350 = vmatprep.subr.mxu0 0.0
    %351 = vmatpush1.xpose.msra.mxu0 0.0
    %352 = vmatprep.subr.mxu0 0.0
    %353 = vmatpush1.xpose.msra.mxu0 %v320
    %354 = vmatprep.subr.mxu0 0.0
    %355 = vmatpush2.xpose.msra.mxu0 0.0
    %356 = vmatprep.subr.mxu0 0.0
    %357 = vmatpush2.xpose.msra.mxu0 0.0
    %358 = vmatprep.subr.mxu0 0.0
    %359 = vmatpush2.xpose.msra.mxu0 0.0
    %360 = vmatprep.subr.mxu0 0.0
    %361 = vmatpush2.xpose.msra.mxu0 0.0
    %362 = vmatprep.subr.mxu0 0.0
    %363 = vmatpush2.xpose.msra.mxu0 0.0
    %364 = vmatprep.subr.mxu0 0.0
    %365 = vmatpush2.xpose.msra.mxu0 0.0
    %366 = vmatprep.subr.mxu0 0.0
    %367 = vmatpush2.xpose.msra.mxu0 0.0
    %368 = vmatprep.subr.mxu0 0.0
    %369 = vmatpush2.xpose.msra.mxu0 0.0
    %370 = vmatprep.subr.mxu0 0.0
    %371 = vmatpush2.xpose.msra.mxu0 0.0
    %372 = vmatprep.subr.mxu0 0.0
    %373 = vmatpush2.xpose.msra.mxu0 0.0
    %374 = vmatprep.subr.mxu0 0.0
    %375 = vmatpush2.xpose.msra.mxu0 0.0
    %376 = vmatprep.subr.mxu0 0.0
    %377 = vmatpush2.xpose.msra.mxu0 0.0
    %378 = vmatprep.subr.mxu0 0.0
    %379 = vmatpush2.xpose.msra.mxu0 0.0
    %380 = vmatprep.subr.mxu0 0.0
    %381 = vmatpush2.xpose.msra.mxu0 0.0
    %382 = vmatprep.subr.mxu0 0.0
    %383 = vmatpush2.xpose.msra.mxu0 0.0
    %384 = vmatprep.subr.mxu0 0.0
    %385 = vmatpush2.xpose.msra.mxu0 0.0
    %386 = vmatprep.mubr.f32.mxu0 0.0
    %387 = vmatmul.mubr.f32.gmra.mxu0 %v318
    %v388 = vpop.f32.mrf.mxu0
    %v389 = vadd.f32 %v146, %v388
    %v390 = vpop.f32.mrf.mxu0
    %391 = vdwg.mxu0
    %v392 = vsel %vm151, %v389, -inf
    %393 = vmax.xlane.f32.xlu0 %v392
    %v394 = vpop.xlane.xlu0 %393
    %v395 = vsub.f32 %v389, %v394
    %v396 = vmul.f32 %v395, 1.442695
    %v397 = vpow.pop %v396
    %v398 = vsel %vm151, %v397, 0.0
    %399 = vadd.xlane.f32.xlu0 %v398
    %v400 = vpop.xlane.xlu0 %399
    %v401 = vrcp.pop %v400
    %v402 = vmul.f32 %v397, %v401
    %403 = vrot.lane.b32.xlu0 %v142, 56
    %v404 = vpop.permute.xlu0 %403
    %v407 = vsel %vm151, %v402, 0
    %409 = vmatprep.subr.mxu0 0.0
    %410 = vmatpush1.msra.mxu0 0.0
    %411 = vmatprep.subr.mxu0 0.0
    %412 = vmatpush1.msra.mxu0 0.0
    %413 = vmatprep.subr.mxu0 0.0
    %414 = vmatpush1.msra.mxu0 0.0
    %415 = vmatprep.subr.mxu0 0.0
    %416 = vmatpush1.msra.mxu0 0.0
    %417 = vmatprep.subr.mxu0 0.0
    %418 = vmatpush1.msra.mxu0 0.0
    %419 = vmatprep.subr.mxu0 0.0
    %420 = vmatpush1.msra.mxu0 0.0
    %421 = vmatprep.subr.mxu0 0.0
    %422 = vmatpush1.msra.mxu0 0.0
    %423 = vmatprep.subr.mxu0 0.0
    %424 = vmatpush1.msra.mxu0 0.0
    %425 = vmatprep.subr.mxu0 0.0
    %426 = vmatpush1.msra.mxu0 0.0
    %427 = vmatprep.subr.mxu0 0.0
    %428 = vmatpush1.msra.mxu0 0.0
    %429 = vmatprep.subr.mxu0 0.0
    %430 = vmatpush1.msra.mxu0 0.0
    %431 = vmatprep.subr.mxu0 0.0
    %432 = vmatpush1.msra.mxu0 0.0
    %433 = vmatprep.subr.mxu0 0.0
    %434 = vmatpush1.msra.mxu0 0.0
    %435 = vmatprep.subr.mxu0 0.0
    %436 = vmatpush1.msra.mxu0 0.0
    %437 = vmatprep.subr.mxu0 0.0
    %438 = vmatpush1.msra.mxu0 0.0
    %439 = vmatprep.subr.mxu0 0.0
    %440 = vmatpush1.msra.mxu0 %v404
    %441 = vmatprep.subr.mxu0 0.0
    %442 = vmatpush2.msra.mxu0 0.0
    %443 = vmatprep.subr.mxu0 0.0
    %444 = vmatpush2.msra.mxu0 0.0
    %445 = vmatprep.subr.mxu0 0.0
    %446 = vmatpush2.msra.mxu0 0.0
    %447 = vmatprep.subr.mxu0 0.0
    %448 = vmatpush2.msra.mxu0 0.0
    %449 = vmatprep.subr.mxu0 0.0
    %450 = vmatpush2.msra.mxu0 0.0
    %451 = vmatprep.subr.mxu0 0.0
    %452 = vmatpush2.msra.mxu0 0.0
    %453 = vmatprep.subr.mxu0 0.0
    %454 = vmatpush2.msra.mxu0 0.0
    %455 = vmatprep.subr.mxu0 0.0
    %456 = vmatpush2.msra.mxu0 0.0
    %457 = vmatprep.subr.mxu0 0.0
    %458 = vmatpush2.msra.mxu0 0.0
    %459 = vmatprep.subr.mxu0 0.0
    %460 = vmatpush2.msra.mxu0 0.0
    %461 = vmatprep.subr.mxu0 0.0
    %462 = vmatpush2.msra.mxu0 0.0
    %463 = vmatprep.subr.mxu0 0.0
    %464 = vmatpush2.msra.mxu0 0.0
    %465 = vmatprep.subr.mxu0 0.0
    %466 = vmatpush2.msra.mxu0 0.0
    %467 = vmatprep.subr.mxu0 0.0
    %468 = vmatpush2.msra.mxu0 0.0
    %469 = vmatprep.subr.mxu0 0.0
    %470 = vmatpush2.msra.mxu0 0.0
    %471 = vmatprep.subr.mxu0 0.0
    %472 = vmatpush2.msra.mxu0 0.0
    %473 = vmatprep.mubr.f32.mxu0 0.0
    %474 = vmatmul.mubr.f32.gmra.mxu0 %v407
    %v475 = vpop.f32.mrf.mxu0
    %v476 = vadd.f32 0.0, %v475
    %v477 = vpop.f32.mrf.mxu0
    %478 = vdwg.mxu0
    %479 = vrot.lane.b32.xlu0 %v147, 112
    %v480 = vpop.permute.xlu0 %479
    %481 = vrot.lane.b32.xlu0 %v142, 80
    %v482 = vpop.permute.xlu0 %481
    %v483 = vsel %vm151, %v480, 0
    %v485 = vsel %vm151, %v482, 0
    %487 = vmatprep.subr.mxu0 0.0
    %488 = vmatpush1.xpose.msra.mxu0 0.0
    %489 = vmatprep.subr.mxu0 0.0
    %490 = vmatpush1.xpose.msra.mxu0 0.0
    %491 = vmatprep.subr.mxu0 0.0
    %492 = vmatpush1.xpose.msra.mxu0 0.0
    %493 = vmatprep.subr.mxu0 0.0
    %494 = vmatpush1.xpose.msra.mxu0 0.0
    %495 = vmatprep.subr.mxu0 0.0
    %496 = vmatpush1.xpose.msra.mxu0 0.0
    %497 = vmatprep.subr.mxu0 0.0
    %498 = vmatpush1.xpose.msra.mxu0 0.0
    %499 = vmatprep.subr.mxu0 0.0
    %500 = vmatpush1.xpose.msra.mxu0 0.0
    %501 = vmatprep.subr.mxu0 0.0
    %502 = vmatpush1.xpose.msra.mxu0 0.0
    %503 = vmatprep.subr.mxu0 0.0
    %504 = vmatpush1.xpose.msra.mxu0 0.0
    %505 = vmatprep.subr.mxu0 0.0
    %506 = vmatpush1.xpose.msra.mxu0 0.0
    %507 = vmatprep.subr.mxu0 0.0
    %508 = vmatpush1.xpose.msra.mxu0 0.0
    %509 = vmatprep.subr.mxu0 0.0
    %510 = vmatpush1.xpose.msra.mxu0 0.0
    %511 = vmatprep.subr.mxu0 0.0
    %512 = vmatpush1.xpose.msra.mxu0 0.0
    %513 = vmatprep.subr.mxu0 0.0
    %514 = vmatpush1.xpose.msra.mxu0 0.0
    %515 = vmatprep.subr.mxu0 0.0
    %516 = vmatpush1.xpose.msra.mxu0 0.0
    %517 = vmatprep.subr.mxu0 0.0
    %518 = vmatpush1.xpose.msra.mxu0 %v485
    %519 = vmatprep.subr.mxu0 0.0
    %520 = vmatpush2.xpose.msra.mxu0 0.0
    %521 = vmatprep.subr.mxu0 0.0
    %522 = vmatpush2.xpose.msra.mxu0 0.0
    %523 = vmatprep.subr.mxu0 0.0
    %524 = vmatpush2.xpose.msra.mxu0 0.0
    %525 = vmatprep.subr.mxu0 0.0
    %526 = vmatpush2.xpose.msra.mxu0 0.0
    %527 = vmatprep.subr.mxu0 0.0
    %528 = vmatpush2.xpose.msra.mxu0 0.0
    %529 = vmatprep.subr.mxu0 0.0
    %530 = vmatpush2.xpose.msra.mxu0 0.0
    %531 = vmatprep.subr.mxu0 0.0
    %532 = vmatpush2.xpose.msra.mxu0 0.0
    %533 = vmatprep.subr.mxu0 0.0
    %534 = vmatpush2.xpose.msra.mxu0 0.0
    %535 = vmatprep.subr.mxu0 0.0
    %536 = vmatpush2.xpose.msra.mxu0 0.0
    %537 = vmatprep.subr.mxu0 0.0
    %538 = vmatpush2.xpose.msra.mxu0 0.0
    %539 = vmatprep.subr.mxu0 0.0
    %540 = vmatpush2.xpose.msra.mxu0 0.0
    %541 = vmatprep.subr.mxu0 0.0
    %542 = vmatpush2.xpose.msra.mxu0 0.0
    %543 = vmatprep.subr.mxu0 0.0
    %544 = vmatpush2.xpose.msra.mxu0 0.0
    %545 = vmatprep.subr.mxu0 0.0
    %546 = vmatpush2.xpose.msra.mxu0 0.0
    %547 = vmatprep.subr.mxu0 0.0
    %548 = vmatpush2.xpose.msra.mxu0 0.0
    %549 = vmatprep.subr.mxu0 0.0
    %550 = vmatpush2.xpose.msra.mxu0 0.0
    %551 = vmatprep.mubr.f32.mxu0 0.0
    %552 = vmatmul.mubr.f32.gmra.mxu0 %v483
    %v553 = vpop.f32.mrf.mxu0
    %v554 = vadd.f32 %v146, %v553
    %v555 = vpop.f32.mrf.mxu0
    %556 = vdwg.mxu0
    %v557 = vsel %vm151, %v554, -inf
    %558 = vmax.xlane.f32.xlu0 %v557
    %v559 = vpop.xlane.xlu0 %558
    %v560 = vsub.f32 %v554, %v559
    %v561 = vmul.f32 %v560, 1.442695
    %v562 = vpow.pop %v561
    %v563 = vsel %vm151, %v562, 0.0
    %564 = vadd.xlane.f32.xlu0 %v563
    %v565 = vpop.xlane.xlu0 %564
    %v566 = vrcp.pop %v565
    %v567 = vmul.f32 %v562, %v566
    %568 = vrot.lane.b32.xlu0 %v142, 48
    %v569 = vpop.permute.xlu0 %568
    %v572 = vsel %vm151, %v567, 0
    %574 = vmatprep.subr.mxu0 0.0
    %575 = vmatpush1.msra.mxu0 0.0
    %576 = vmatprep.subr.mxu0 0.0
    %577 = vmatpush1.msra.mxu0 0.0
    %578 = vmatprep.subr.mxu0 0.0
    %579 = vmatpush1.msra.mxu0 0.0
    %580 = vmatprep.subr.mxu0 0.0
    %581 = vmatpush1.msra.mxu0 0.0
    %582 = vmatprep.subr.mxu0 0.0
    %583 = vmatpush1.msra.mxu0 0.0
    %584 = vmatprep.subr.mxu0 0.0
    %585 = vmatpush1.msra.mxu0 0.0
    %586 = vmatprep.subr.mxu0 0.0
    %587 = vmatpush1.msra.mxu0 0.0
    %588 = vmatprep.subr.mxu0 0.0
    %589 = vmatpush1.msra.mxu0 0.0
    %590 = vmatprep.subr.mxu0 0.0
    %591 = vmatpush1.msra.mxu0 0.0
    %592 = vmatprep.subr.mxu0 0.0
    %593 = vmatpush1.msra.mxu0 0.0
    %594 = vmatprep.subr.mxu0 0.0
    %595 = vmatpush1.msra.mxu0 0.0
    %596 = vmatprep.subr.mxu0 0.0
    %597 = vmatpush1.msra.mxu0 0.0
    %598 = vmatprep.subr.mxu0 0.0
    %599 = vmatpush1.msra.mxu0 0.0
    %600 = vmatprep.subr.mxu0 0.0
    %601 = vmatpush1.msra.mxu0 0.0
    %602 = vmatprep.subr.mxu0 0.0
    %603 = vmatpush1.msra.mxu0 0.0
    %604 = vmatprep.subr.mxu0 0.0
    %605 = vmatpush1.msra.mxu0 %v569
    %606 = vmatprep.subr.mxu0 0.0
    %607 = vmatpush2.msra.mxu0 0.0
    %608 = vmatprep.subr.mxu0 0.0
    %609 = vmatpush2.msra.mxu0 0.0
    %610 = vmatprep.subr.mxu0 0.0
    %611 = vmatpush2.msra.mxu0 0.0
    %612 = vmatprep.subr.mxu0 0.0
    %613 = vmatpush2.msra.mxu0 0.0
    %614 = vmatprep.subr.mxu0 0.0
    %615 = vmatpush2.msra.mxu0 0.0
    %616 = vmatprep.subr.mxu0 0.0
    %617 = vmatpush2.msra.mxu0 0.0
    %618 = vmatprep.subr.mxu0 0.0
    %619 = vmatpush2.msra.mxu0 0.0
    %620 = vmatprep.subr.mxu0 0.0
    %621 = vmatpush2.msra.mxu0 0.0
    %622 = vmatprep.subr.mxu0 0.0
    %623 = vmatpush2.msra.mxu0 0.0
    %624 = vmatprep.subr.mxu0 0.0
    %625 = vmatpush2.msra.mxu0 0.0
    %626 = vmatprep.subr.mxu0 0.0
    %627 = vmatpush2.msra.mxu0 0.0
    %628 = vmatprep.subr.mxu0 0.0
    %629 = vmatpush2.msra.mxu0 0.0
    %630 = vmatprep.subr.mxu0 0.0
    %631 = vmatpush2.msra.mxu0 0.0
    %632 = vmatprep.subr.mxu0 0.0
    %633 = vmatpush2.msra.mxu0 0.0
    %634 = vmatprep.subr.mxu0 0.0
    %635 = vmatpush2.msra.mxu0 0.0
    %636 = vmatprep.subr.mxu0 0.0
    %637 = vmatpush2.msra.mxu0 0.0
    %638 = vmatprep.mubr.f32.mxu0 0.0
    %639 = vmatmul.mubr.f32.gmra.mxu0 %v572
    %v640 = vpop.f32.mrf.mxu0
    %v641 = vadd.f32 0.0, %v640
    %v642 = vpop.f32.mrf.mxu0
    %643 = vdwg.mxu0
    %644 = vrot.lane.b32.xlu0 %v147, 104
    %v645 = vpop.permute.xlu0 %644
    %646 = vrot.lane.b32.xlu0 %v142, 72
    %v647 = vpop.permute.xlu0 %646
    %v648 = vsel %vm151, %v645, 0
    %v650 = vsel %vm151, %v647, 0
    %652 = vmatprep.subr.mxu0 0.0
    %653 = vmatpush1.xpose.msra.mxu0 0.0
    %654 = vmatprep.subr.mxu0 0.0
    %655 = vmatpush1.xpose.msra.mxu0 0.0
    %656 = vmatprep.subr.mxu0 0.0
    %657 = vmatpush1.xpose.msra.mxu0 0.0
    %658 = vmatprep.subr.mxu0 0.0
    %659 = vmatpush1.xpose.msra.mxu0 0.0
    %660 = vmatprep.subr.mxu0 0.0
    %661 = vmatpush1.xpose.msra.mxu0 0.0
    %662 = vmatprep.subr.mxu0 0.0
    %663 = vmatpush1.xpose.msra.mxu0 0.0
    %664 = vmatprep.subr.mxu0 0.0
    %665 = vmatpush1.xpose.msra.mxu0 0.0
    %666 = vmatprep.subr.mxu0 0.0
    %667 = vmatpush1.xpose.msra.mxu0 0.0
    %668 = vmatprep.subr.mxu0 0.0
    %669 = vmatpush1.xpose.msra.mxu0 0.0
    %670 = vmatprep.subr.mxu0 0.0
    %671 = vmatpush1.xpose.msra.mxu0 0.0
    %672 = vmatprep.subr.mxu0 0.0
    %673 = vmatpush1.xpose.msra.mxu0 0.0
    %674 = vmatprep.subr.mxu0 0.0
    %675 = vmatpush1.xpose.msra.mxu0 0.0
    %676 = vmatprep.subr.mxu0 0.0
    %677 = vmatpush1.xpose.msra.mxu0 0.0
    %678 = vmatprep.subr.mxu0 0.0
    %679 = vmatpush1.xpose.msra.mxu0 0.0
    %680 = vmatprep.subr.mxu0 0.0
    %681 = vmatpush1.xpose.msra.mxu0 0.0
    %682 = vmatprep.subr.mxu0 0.0
    %683 = vmatpush1.xpose.msra.mxu0 %v650
    %684 = vmatprep.subr.mxu0 0.0
    %685 = vmatpush2.xpose.msra.mxu0 0.0
    %686 = vmatprep.subr.mxu0 0.0
    %687 = vmatpush2.xpose.msra.mxu0 0.0
    %688 = vmatprep.subr.mxu0 0.0
    %689 = vmatpush2.xpose.msra.mxu0 0.0
    %690 = vmatprep.subr.mxu0 0.0
    %691 = vmatpush2.xpose.msra.mxu0 0.0
    %692 = vmatprep.subr.mxu0 0.0
    %693 = vmatpush2.xpose.msra.mxu0 0.0
    %694 = vmatprep.subr.mxu0 0.0
    %695 = vmatpush2.xpose.msra.mxu0 0.0
    %696 = vmatprep.subr.mxu0 0.0
    %697 = vmatpush2.xpose.msra.mxu0 0.0
    %698 = vmatprep.subr.mxu0 0.0
    %699 = vmatpush2.xpose.msra.mxu0 0.0
    %700 = vmatprep.subr.mxu0 0.0
    %701 = vmatpush2.xpose.msra.mxu0 0.0
    %702 = vmatprep.subr.mxu0 0.0
    %703 = vmatpush2.xpose.msra.mxu0 0.0
    %704 = vmatprep.subr.mxu0 0.0
    %705 = vmatpush2.xpose.msra.mxu0 0.0
    %706 = vmatprep.subr.mxu0 0.0
    %707 = vmatpush2.xpose.msra.mxu0 0.0
    %708 = vmatprep.subr.mxu0 0.0
    %709 = vmatpush2.xpose.msra.mxu0 0.0
    %710 = vmatprep.subr.mxu0 0.0
    %711 = vmatpush2.xpose.msra.mxu0 0.0
    %712 = vmatprep.subr.mxu0 0.0
    %713 = vmatpush2.xpose.msra.mxu0 0.0
    %714 = vmatprep.subr.mxu0 0.0
    %715 = vmatpush2.xpose.msra.mxu0 0.0
    %716 = vmatprep.mubr.f32.mxu0 0.0
    %717 = vmatmul.mubr.f32.gmra.mxu0 %v648
    %v718 = vpop.f32.mrf.mxu0
    %v719 = vadd.f32 %v146, %v718
    %v720 = vpop.f32.mrf.mxu0
    %721 = vdwg.mxu0
    %v722 = vsel %vm151, %v719, -inf
    %723 = vmax.xlane.f32.xlu0 %v722
    %v724 = vpop.xlane.xlu0 %723
    %v725 = vsub.f32 %v719, %v724
    %v726 = vmul.f32 %v725, 1.442695
    %v727 = vpow.pop %v726
    %v728 = vsel %vm151, %v727, 0.0
    %729 = vadd.xlane.f32.xlu0 %v728
    %v730 = vpop.xlane.xlu0 %729
    %v731 = vrcp.pop %v730
    %v732 = vmul.f32 %v727, %v731
    %733 = vrot.lane.b32.xlu0 %v142, 40
    %v734 = vpop.permute.xlu0 %733
    %v737 = vsel %vm151, %v732, 0
    %739 = vmatprep.subr.mxu0 0.0
    %740 = vmatpush1.msra.mxu0 0.0
    %741 = vmatprep.subr.mxu0 0.0
    %742 = vmatpush1.msra.mxu0 0.0
    %743 = vmatprep.subr.mxu0 0.0
    %744 = vmatpush1.msra.mxu0 0.0
    %745 = vmatprep.subr.mxu0 0.0
    %746 = vmatpush1.msra.mxu0 0.0
    %747 = vmatprep.subr.mxu0 0.0
    %748 = vmatpush1.msra.mxu0 0.0
    %749 = vmatprep.subr.mxu0 0.0
    %750 = vmatpush1.msra.mxu0 0.0
    %751 = vmatprep.subr.mxu0 0.0
    %752 = vmatpush1.msra.mxu0 0.0
    %753 = vmatprep.subr.mxu0 0.0
    %754 = vmatpush1.msra.mxu0 0.0
    %755 = vmatprep.subr.mxu0 0.0
    %756 = vmatpush1.msra.mxu0 0.0
    %757 = vmatprep.subr.mxu0 0.0
    %758 = vmatpush1.msra.mxu0 0.0
    %759 = vmatprep.subr.mxu0 0.0
    %760 = vmatpush1.msra.mxu0 0.0
    %761 = vmatprep.subr.mxu0 0.0
    %762 = vmatpush1.msra.mxu0 0.0
    %763 = vmatprep.subr.mxu0 0.0
    %764 = vmatpush1.msra.mxu0 0.0
    %765 = vmatprep.subr.mxu0 0.0
    %766 = vmatpush1.msra.mxu0 0.0
    %767 = vmatprep.subr.mxu0 0.0
    %768 = vmatpush1.msra.mxu0 0.0
    %769 = vmatprep.subr.mxu0 0.0
    %770 = vmatpush1.msra.mxu0 %v734
    %771 = vmatprep.subr.mxu0 0.0
    %772 = vmatpush2.msra.mxu0 0.0
    %773 = vmatprep.subr.mxu0 0.0
    %774 = vmatpush2.msra.mxu0 0.0
    %775 = vmatprep.subr.mxu0 0.0
    %776 = vmatpush2.msra.mxu0 0.0
    %777 = vmatprep.subr.mxu0 0.0
    %778 = vmatpush2.msra.mxu0 0.0
    %779 = vmatprep.subr.mxu0 0.0
    %780 = vmatpush2.msra.mxu0 0.0
    %781 = vmatprep.subr.mxu0 0.0
    %782 = vmatpush2.msra.mxu0 0.0
    %783 = vmatprep.subr.mxu0 0.0
    %784 = vmatpush2.msra.mxu0 0.0
    %785 = vmatprep.subr.mxu0 0.0
    %786 = vmatpush2.msra.mxu0 0.0
    %787 = vmatprep.subr.mxu0 0.0
    %788 = vmatpush2.msra.mxu0 0.0
    %789 = vmatprep.subr.mxu0 0.0
    %790 = vmatpush2.msra.mxu0 0.0
    %791 = vmatprep.subr.mxu0 0.0
    %792 = vmatpush2.msra.mxu0 0.0
    %793 = vmatprep.subr.mxu0 0.0
    %794 = vmatpush2.msra.mxu0 0.0
    %795 = vmatprep.subr.mxu0 0.0
    %796 = vmatpush2.msra.mxu0 0.0
    %797 = vmatprep.subr.mxu0 0.0
    %798 = vmatpush2.msra.mxu0 0.0
    %799 = vmatprep.subr.mxu0 0.0
    %800 = vmatpush2.msra.mxu0 0.0
    %801 = vmatprep.subr.mxu0 0.0
    %802 = vmatpush2.msra.mxu0 0.0
    %803 = vmatprep.mubr.f32.mxu0 0.0
    %804 = vmatmul.mubr.f32.gmra.mxu0 %v737
    %v805 = vpop.f32.mrf.mxu0
    %v806 = vadd.f32 0.0, %v805
    %v807 = vpop.f32.mrf.mxu0
    %808 = vdwg.mxu0
    %810 = vrot.lane.b32.xlu0 %v476, 8
    %v811 = vpop.permute.xlu0 %810
    %814 = vrot.lane.b32.xlu0 %v641, 16
    %v815 = vpop.permute.xlu0 %814
    %818 = vrot.lane.b32.xlu0 %v806, 24
    %v819 = vpop.permute.xlu0 %818
    %v821 = vsel %vm151, %v311, %v811
    %vm822 = vcmask 130048
    %v823 = vsel %vm822, %v821, %v815
    %vm824 = vcmask 195584
    %v825 = vsel %vm824, %v823, %v819
    %v826 = vadd.f32 %v825, %v64
    %827 = vst.msk [vmem:[#allocation8] sm:$0xff] %vm71, %v826
    %s828 = scalar_lea.vmem [#allocation5], 8
    %v829 = vld [vmem:[%s828] sm:$0xff]
    %v831 = vsel %vm71, %v829, 0
    %833 = vmatprep.subr.mxu0 0.0
    %834 = vmatpush1.msra.mxu0 0.0
    %835 = vmatprep.subr.mxu0 0.0
    %836 = vmatpush1.msra.mxu0 0.0
    %837 = vmatprep.subr.mxu0 0.0
    %838 = vmatpush1.msra.mxu0 0.0
    %839 = vmatprep.subr.mxu0 0.0
    %840 = vmatpush1.msra.mxu0 0.0
    %841 = vmatprep.subr.mxu0 0.0
    %842 = vmatpush1.msra.mxu0 0.0
    %843 = vmatprep.subr.mxu0 0.0
    %844 = vmatpush1.msra.mxu0 0.0
    %845 = vmatprep.subr.mxu0 0.0
    %846 = vmatpush1.msra.mxu0 0.0
    %847 = vmatprep.subr.mxu0 0.0
    %848 = vmatpush1.msra.mxu0 0.0
    %849 = vmatprep.subr.mxu0 0.0
    %850 = vmatpush1.msra.mxu0 0.0
    %851 = vmatprep.subr.mxu0 0.0
    %852 = vmatpush1.msra.mxu0 0.0
    %853 = vmatprep.subr.mxu0 0.0
    %854 = vmatpush1.msra.mxu0 0.0
    %855 = vmatprep.subr.mxu0 0.0
    %856 = vmatpush1.msra.mxu0 0.0
    %857 = vmatprep.subr.mxu0 0.0
    %858 = vmatpush1.msra.mxu0 %v62
    %859 = vmatprep.subr.mxu0 0.0
    %860 = vmatpush1.msra.mxu0 %v61
    %861 = vmatprep.subr.mxu0 0.0
    %862 = vmatpush1.msra.mxu0 %v60
    %863 = vmatprep.subr.mxu0 0.0
    %864 = vmatpush1.msra.mxu0 %v59
    %865 = vmatprep.subr.mxu0 0.0
    %866 = vmatpush2.msra.mxu0 0.0
    %867 = vmatprep.subr.mxu0 0.0
    %868 = vmatpush2.msra.mxu0 0.0
    %869 = vmatprep.subr.mxu0 0.0
    %870 = vmatpush2.msra.mxu0 0.0
    %871 = vmatprep.subr.mxu0 0.0
    %872 = vmatpush2.msra.mxu0 0.0
    %873 = vmatprep.subr.mxu0 0.0
    %874 = vmatpush2.msra.mxu0 0.0
    %875 = vmatprep.subr.mxu0 0.0
    %876 = vmatpush2.msra.mxu0 0.0
    %877 = vmatprep.subr.mxu0 0.0
    %878 = vmatpush2.msra.mxu0 0.0
    %879 = vmatprep.subr.mxu0 0.0
    %880 = vmatpush2.msra.mxu0 0.0
    %881 = vmatprep.subr.mxu0 0.0
    %882 = vmatpush2.msra.mxu0 0.0
    %883 = vmatprep.subr.mxu0 0.0
    %884 = vmatpush2.msra.mxu0 0.0
    %885 = vmatprep.subr.mxu0 0.0
    %886 = vmatpush2.msra.mxu0 0.0
    %887 = vmatprep.subr.mxu0 0.0
    %888 = vmatpush2.msra.mxu0 0.0
    %889 = vmatprep.subr.mxu0 0.0
    %890 = vmatpush2.msra.mxu0 0.0
    %891 = vmatprep.subr.mxu0 0.0
    %892 = vmatpush2.msra.mxu0 0.0
    %893 = vmatprep.subr.mxu0 0.0
    %894 = vmatpush2.msra.mxu0 0.0
    %895 = vmatprep.subr.mxu0 0.0
    %896 = vmatpush2.msra.mxu0 0.0
    %897 = vmatprep.mubr.f32.mxu0 0.0
    %898 = vmatmul.mubr.f32.gmra.mxu0 %v831
    %v899 = vpop.f32.mrf.mxu0
    %v900 = vadd.f32 %v69, %v899
    %v901 = vpop.f32.mrf.mxu0
    %902 = vdwg.mxu0
    %s903 = scalar_lea.vmem [#allocation2], 4
    %v904 = vld [vmem:[%s903] sm:$0xf]
    %v905 = vunpack.c.l.bf16 %v904
    %v906 = vmul.f32 %v900, 0.35355338
    %908 = vrot.lane.b32.xlu0 %v900, 96
    %v909 = vpop.permute.xlu0 %908
    %v911 = vsel %vm151, %v906, 0
    %v913 = vsel %vm151, %v909, 0
    %915 = vmatprep.subr.mxu0 0.0
    %916 = vmatpush1.xpose.msra.mxu0 0.0
    %917 = vmatprep.subr.mxu0 0.0
    %918 = vmatpush1.xpose.msra.mxu0 0.0
    %919 = vmatprep.subr.mxu0 0.0
    %920 = vmatpush1.xpose.msra.mxu0 0.0
    %921 = vmatprep.subr.mxu0 0.0
    %922 = vmatpush1.xpose.msra.mxu0 0.0
    %923 = vmatprep.subr.mxu0 0.0
    %924 = vmatpush1.xpose.msra.mxu0 0.0
    %925 = vmatprep.subr.mxu0 0.0
    %926 = vmatpush1.xpose.msra.mxu0 0.0
    %927 = vmatprep.subr.mxu0 0.0
    %928 = vmatpush1.xpose.msra.mxu0 0.0
    %929 = vmatprep.subr.mxu0 0.0
    %930 = vmatpush1.xpose.msra.mxu0 0.0
    %931 = vmatprep.subr.mxu0 0.0
    %932 = vmatpush1.xpose.msra.mxu0 0.0
    %933 = vmatprep.subr.mxu0 0.0
    %934 = vmatpush1.xpose.msra.mxu0 0.0
    %935 = vmatprep.subr.mxu0 0.0
    %936 = vmatpush1.xpose.msra.mxu0 0.0
    %937 = vmatprep.subr.mxu0 0.0
    %938 = vmatpush1.xpose.msra.mxu0 0.0
    %939 = vmatprep.subr.mxu0 0.0
    %940 = vmatpush1.xpose.msra.mxu0 0.0
    %941 = vmatprep.subr.mxu0 0.0
    %942 = vmatpush1.xpose.msra.mxu0 0.0
    %943 = vmatprep.subr.mxu0 0.0
    %944 = vmatpush1.xpose.msra.mxu0 0.0
    %945 = vmatprep.subr.mxu0 0.0
    %946 = vmatpush1.xpose.msra.mxu0 %v913
    %947 = vmatprep.subr.mxu0 0.0
    %948 = vmatpush2.xpose.msra.mxu0 0.0
    %949 = vmatprep.subr.mxu0 0.0
    %950 = vmatpush2.xpose.msra.mxu0 0.0
    %951 = vmatprep.subr.mxu0 0.0
    %952 = vmatpush2.xpose.msra.mxu0 0.0
    %953 = vmatprep.subr.mxu0 0.0
    %954 = vmatpush2.xpose.msra.mxu0 0.0
    %955 = vmatprep.subr.mxu0 0.0
    %956 = vmatpush2.xpose.msra.mxu0 0.0
    %957 = vmatprep.subr.mxu0 0.0
    %958 = vmatpush2.xpose.msra.mxu0 0.0
    %959 = vmatprep.subr.mxu0 0.0
    %960 = vmatpush2.xpose.msra.mxu0 0.0
    %961 = vmatprep.subr.mxu0 0.0
    %962 = vmatpush2.xpose.msra.mxu0 0.0
    %963 = vmatprep.subr.mxu0 0.0
    %964 = vmatpush2.xpose.msra.mxu0 0.0
    %965 = vmatprep.subr.mxu0 0.0
    %966 = vmatpush2.xpose.msra.mxu0 0.0
    %967 = vmatprep.subr.mxu0 0.0
    %968 = vmatpush2.xpose.msra.mxu0 0.0
    %969 = vmatprep.subr.mxu0 0.0
    %970 = vmatpush2.xpose.msra.mxu0 0.0
    %971 = vmatprep.subr.mxu0 0.0
    %972 = vmatpush2.xpose.msra.mxu0 0.0
    %973 = vmatprep.subr.mxu0 0.0
    %974 = vmatpush2.xpose.msra.mxu0 0.0
    %975 = vmatprep.subr.mxu0 0.0
    %976 = vmatpush2.xpose.msra.mxu0 0.0
    %977 = vmatprep.subr.mxu0 0.0
    %978 = vmatpush2.xpose.msra.mxu0 0.0
    %979 = vmatprep.mubr.f32.mxu0 0.0
    %980 = vmatmul.mubr.f32.gmra.mxu0 %v911
    %v981 = vpop.f32.mrf.mxu0
    %v982 = vadd.f32 %v905, %v981
    %v983 = vpop.f32.mrf.mxu0
    %984 = vdwg.mxu0
    %v985 = vsel %vm151, %v982, -inf
    %986 = vmax.xlane.f32.xlu0 %v985
    %v987 = vpop.xlane.xlu0 %986
    %v988 = vsub.f32 %v982, %v987
    %v989 = vmul.f32 %v988, 1.442695
    %v990 = vpow.pop %v989
    %v991 = vsel %vm151, %v990, 0.0
    %992 = vadd.xlane.f32.xlu0 %v991
    %v993 = vpop.xlane.xlu0 %992
    %v994 = vrcp.pop %v993
    %v995 = vmul.f32 %v990, %v994
    %996 = vrot.lane.b32.xlu0 %v900, 64
    %v997 = vpop.permute.xlu0 %996
    %v1000 = vsel %vm151, %v995, 0
    %1002 = vmatprep.subr.mxu0 0.0
    %1003 = vmatpush1.msra.mxu0 0.0
    %1004 = vmatprep.subr.mxu0 0.0
    %1005 = vmatpush1.msra.mxu0 0.0
    %1006 = vmatprep.subr.mxu0 0.0
    %1007 = vmatpush1.msra.mxu0 0.0
    %1008 = vmatprep.subr.mxu0 0.0
    %1009 = vmatpush1.msra.mxu0 0.0
    %1010 = vmatprep.subr.mxu0 0.0
    %1011 = vmatpush1.msra.mxu0 0.0
    %1012 = vmatprep.subr.mxu0 0.0
    %1013 = vmatpush1.msra.mxu0 0.0
    %1014 = vmatprep.subr.mxu0 0.0
    %1015 = vmatpush1.msra.mxu0 0.0
    %1016 = vmatprep.subr.mxu0 0.0
    %1017 = vmatpush1.msra.mxu0 0.0
    %1018 = vmatprep.subr.mxu0 0.0
    %1019 = vmatpush1.msra.mxu0 0.0
    %1020 = vmatprep.subr.mxu0 0.0
    %1021 = vmatpush1.msra.mxu0 0.0
    %1022 = vmatprep.subr.mxu0 0.0
    %1023 = vmatpush1.msra.mxu0 0.0
    %1024 = vmatprep.subr.mxu0 0.0
    %1025 = vmatpush1.msra.mxu0 0.0
    %1026 = vmatprep.subr.mxu0 0.0
    %1027 = vmatpush1.msra.mxu0 0.0
    %1028 = vmatprep.subr.mxu0 0.0
    %1029 = vmatpush1.msra.mxu0 0.0
    %1030 = vmatprep.subr.mxu0 0.0
    %1031 = vmatpush1.msra.mxu0 0.0
    %1032 = vmatprep.subr.mxu0 0.0
    %1033 = vmatpush1.msra.mxu0 %v997
    %1034 = vmatprep.subr.mxu0 0.0
    %1035 = vmatpush2.msra.mxu0 0.0
    %1036 = vmatprep.subr.mxu0 0.0
    %1037 = vmatpush2.msra.mxu0 0.0
    %1038 = vmatprep.subr.mxu0 0.0
    %1039 = vmatpush2.msra.mxu0 0.0
    %1040 = vmatprep.subr.mxu0 0.0
    %1041 = vmatpush2.msra.mxu0 0.0
    %1042 = vmatprep.subr.mxu0 0.0
    %1043 = vmatpush2.msra.mxu0 0.0
    %1044 = vmatprep.subr.mxu0 0.0
    %1045 = vmatpush2.msra.mxu0 0.0
    %1046 = vmatprep.subr.mxu0 0.0
    %1047 = vmatpush2.msra.mxu0 0.0
    %1048 = vmatprep.subr.mxu0 0.0
    %1049 = vmatpush2.msra.mxu0 0.0
    %1050 = vmatprep.subr.mxu0 0.0
    %1051 = vmatpush2.msra.mxu0 0.0
    %1052 = vmatprep.subr.mxu0 0.0
    %1053 = vmatpush2.msra.mxu0 0.0
    %1054 = vmatprep.subr.mxu0 0.0
    %1055 = vmatpush2.msra.mxu0 0.0
    %1056 = vmatprep.subr.mxu0 0.0
    %1057 = vmatpush2.msra.mxu0 0.0
    %1058 = vmatprep.subr.mxu0 0.0
    %1059 = vmatpush2.msra.mxu0 0.0
    %1060 = vmatprep.subr.mxu0 0.0
    %1061 = vmatpush2.msra.mxu0 0.0
    %1062 = vmatprep.subr.mxu0 0.0
    %1063 = vmatpush2.msra.mxu0 0.0
    %1064 = vmatprep.subr.mxu0 0.0
    %1065 = vmatpush2.msra.mxu0 0.0
    %1066 = vmatprep.mubr.f32.mxu0 0.0
    %1067 = vmatmul.mubr.f32.gmra.mxu0 %v1000
    %v1068 = vpop.f32.mrf.mxu0
    %v1069 = vadd.f32 0.0, %v1068
    %v1070 = vpop.f32.mrf.mxu0
    %1071 = vdwg.mxu0
    %1072 = vrot.lane.b32.xlu0 %v906, 120
    %v1073 = vpop.permute.xlu0 %1072
    %1074 = vrot.lane.b32.xlu0 %v900, 88
    %v1075 = vpop.permute.xlu0 %1074
    %v1076 = vsel %vm151, %v1073, 0
    %v1078 = vsel %vm151, %v1075, 0
    %1080 = vmatprep.subr.mxu0 0.0
    %1081 = vmatpush1.xpose.msra.mxu0 0.0
    %1082 = vmatprep.subr.mxu0 0.0
    %1083 = vmatpush1.xpose.msra.mxu0 0.0
    %1084 = vmatprep.subr.mxu0 0.0
    %1085 = vmatpush1.xpose.msra.mxu0 0.0
    %1086 = vmatprep.subr.mxu0 0.0
    %1087 = vmatpush1.xpose.msra.mxu0 0.0
    %1088 = vmatprep.subr.mxu0 0.0
    %1089 = vmatpush1.xpose.msra.mxu0 0.0
    %1090 = vmatprep.subr.mxu0 0.0
    %1091 = vmatpush1.xpose.msra.mxu0 0.0
    %1092 = vmatprep.subr.mxu0 0.0
    %1093 = vmatpush1.xpose.msra.mxu0 0.0
    %1094 = vmatprep.subr.mxu0 0.0
    %1095 = vmatpush1.xpose.msra.mxu0 0.0
    %1096 = vmatprep.subr.mxu0 0.0
    %1097 = vmatpush1.xpose.msra.mxu0 0.0
    %1098 = vmatprep.subr.mxu0 0.0
    %1099 = vmatpush1.xpose.msra.mxu0 0.0
    %1100 = vmatprep.subr.mxu0 0.0
    %1101 = vmatpush1.xpose.msra.mxu0 0.0
    %1102 = vmatprep.subr.mxu0 0.0
    %1103 = vmatpush1.xpose.msra.mxu0 0.0
    %1104 = vmatprep.subr.mxu0 0.0
    %1105 = vmatpush1.xpose.msra.mxu0 0.0
    %1106 = vmatprep.subr.mxu0 0.0
    %1107 = vmatpush1.xpose.msra.mxu0 0.0
    %1108 = vmatprep.subr.mxu0 0.0
    %1109 = vmatpush1.xpose.msra.mxu0 0.0
    %1110 = vmatprep.subr.mxu0 0.0
    %1111 = vmatpush1.xpose.msra.mxu0 %v1078
    %1112 = vmatprep.subr.mxu0 0.0
    %1113 = vmatpush2.xpose.msra.mxu0 0.0
    %1114 = vmatprep.subr.mxu0 0.0
    %1115 = vmatpush2.xpose.msra.mxu0 0.0
    %1116 = vmatprep.subr.mxu0 0.0
    %1117 = vmatpush2.xpose.msra.mxu0 0.0
    %1118 = vmatprep.subr.mxu0 0.0
    %1119 = vmatpush2.xpose.msra.mxu0 0.0
    %1120 = vmatprep.subr.mxu0 0.0
    %1121 = vmatpush2.xpose.msra.mxu0 0.0
    %1122 = vmatprep.subr.mxu0 0.0
    %1123 = vmatpush2.xpose.msra.mxu0 0.0
    %1124 = vmatprep.subr.mxu0 0.0
    %1125 = vmatpush2.xpose.msra.mxu0 0.0
    %1126 = vmatprep.subr.mxu0 0.0
    %1127 = vmatpush2.xpose.msra.mxu0 0.0
    %1128 = vmatprep.subr.mxu0 0.0
    %1129 = vmatpush2.xpose.msra.mxu0 0.0
    %1130 = vmatprep.subr.mxu0 0.0
    %1131 = vmatpush2.xpose.msra.mxu0 0.0
    %1132 = vmatprep.subr.mxu0 0.0
    %1133 = vmatpush2.xpose.msra.mxu0 0.0
    %1134 = vmatprep.subr.mxu0 0.0
    %1135 = vmatpush2.xpose.msra.mxu0 0.0
    %1136 = vmatprep.subr.mxu0 0.0
    %1137 = vmatpush2.xpose.msra.mxu0 0.0
    %1138 = vmatprep.subr.mxu0 0.0
    %1139 = vmatpush2.xpose.msra.mxu0 0.0
    %1140 = vmatprep.subr.mxu0 0.0
    %1141 = vmatpush2.xpose.msra.mxu0 0.0
    %1142 = vmatprep.subr.mxu0 0.0
    %1143 = vmatpush2.xpose.msra.mxu0 0.0
    %1144 = vmatprep.mubr.f32.mxu0 0.0
    %1145 = vmatmul.mubr.f32.gmra.mxu0 %v1076
    %v1146 = vpop.f32.mrf.mxu0
    %v1147 = vadd.f32 %v905, %v1146
    %v1148 = vpop.f32.mrf.mxu0
    %1149 = vdwg.mxu0
    %v1150 = vsel %vm151, %v1147, -inf
    %1151 = vmax.xlane.f32.xlu0 %v1150
    %v1152 = vpop.xlane.xlu0 %1151
    %v1153 = vsub.f32 %v1147, %v1152
    %v1154 = vmul.f32 %v1153, 1.442695
    %v1155 = vpow.pop %v1154
    %v1156 = vsel %vm151, %v1155, 0.0
    %1157 = vadd.xlane.f32.xlu0 %v1156
    %v1158 = vpop.xlane.xlu0 %1157
    %v1159 = vrcp.pop %v1158
    %v1160 = vmul.f32 %v1155, %v1159
    %1161 = vrot.lane.b32.xlu0 %v900, 56
    %v1162 = vpop.permute.xlu0 %1161
    %v1165 = vsel %vm151, %v1160, 0
    %1167 = vmatprep.subr.mxu0 0.0
    %1168 = vmatpush1.msra.mxu0 0.0
    %1169 = vmatprep.subr.mxu0 0.0
    %1170 = vmatpush1.msra.mxu0 0.0
    %1171 = vmatprep.subr.mxu0 0.0
    %1172 = vmatpush1.msra.mxu0 0.0
    %1173 = vmatprep.subr.mxu0 0.0
    %1174 = vmatpush1.msra.mxu0 0.0
    %1175 = vmatprep.subr.mxu0 0.0
    %1176 = vmatpush1.msra.mxu0 0.0
    %1177 = vmatprep.subr.mxu0 0.0
    %1178 = vmatpush1.msra.mxu0 0.0
    %1179 = vmatprep.subr.mxu0 0.0
    %1180 = vmatpush1.msra.mxu0 0.0
    %1181 = vmatprep.subr.mxu0 0.0
    %1182 = vmatpush1.msra.mxu0 0.0
    %1183 = vmatprep.subr.mxu0 0.0
    %1184 = vmatpush1.msra.mxu0 0.0
    %1185 = vmatprep.subr.mxu0 0.0
    %1186 = vmatpush1.msra.mxu0 0.0
    %1187 = vmatprep.subr.mxu0 0.0
    %1188 = vmatpush1.msra.mxu0 0.0
    %1189 = vmatprep.subr.mxu0 0.0
    %1190 = vmatpush1.msra.mxu0 0.0
    %1191 = vmatprep.subr.mxu0 0.0
    %1192 = vmatpush1.msra.mxu0 0.0
    %1193 = vmatprep.subr.mxu0 0.0
    %1194 = vmatpush1.msra.mxu0 0.0
    %1195 = vmatprep.subr.mxu0 0.0
    %1196 = vmatpush1.msra.mxu0 0.0
    %1197 = vmatprep.subr.mxu0 0.0
    %1198 = vmatpush1.msra.mxu0 %v1162
    %1199 = vmatprep.subr.mxu0 0.0
    %1200 = vmatpush2.msra.mxu0 0.0
    %1201 = vmatprep.subr.mxu0 0.0
    %1202 = vmatpush2.msra.mxu0 0.0
    %1203 = vmatprep.subr.mxu0 0.0
    %1204 = vmatpush2.msra.mxu0 0.0
    %1205 = vmatprep.subr.mxu0 0.0
    %1206 = vmatpush2.msra.mxu0 0.0
    %1207 = vmatprep.subr.mxu0 0.0
    %1208 = vmatpush2.msra.mxu0 0.0
    %1209 = vmatprep.subr.mxu0 0.0
    %1210 = vmatpush2.msra.mxu0 0.0
    %1211 = vmatprep.subr.mxu0 0.0
    %1212 = vmatpush2.msra.mxu0 0.0
    %1213 = vmatprep.subr.mxu0 0.0
    %1214 = vmatpush2.msra.mxu0 0.0
    %1215 = vmatprep.subr.mxu0 0.0
    %1216 = vmatpush2.msra.mxu0 0.0
    %1217 = vmatprep.subr.mxu0 0.0
    %1218 = vmatpush2.msra.mxu0 0.0
    %1219 = vmatprep.subr.mxu0 0.0
    %1220 = vmatpush2.msra.mxu0 0.0
    %1221 = vmatprep.subr.mxu0 0.0
    %1222 = vmatpush2.msra.mxu0 0.0
    %1223 = vmatprep.subr.mxu0 0.0
    %1224 = vmatpush2.msra.mxu0 0.0
    %1225 = vmatprep.subr.mxu0 0.0
    %1226 = vmatpush2.msra.mxu0 0.0
    %1227 = vmatprep.subr.mxu0 0.0
    %1228 = vmatpush2.msra.mxu0 0.0
    %1229 = vmatprep.subr.mxu0 0.0
    %1230 = vmatpush2.msra.mxu0 0.0
    %1231 = vmatprep.mubr.f32.mxu0 0.0
    %1232 = vmatmul.mubr.f32.gmra.mxu0 %v1165
    %v1233 = vpop.f32.mrf.mxu0
    %v1234 = vadd.f32 0.0, %v1233
    %v1235 = vpop.f32.mrf.mxu0
    %1236 = vdwg.mxu0
    %1237 = vrot.lane.b32.xlu0 %v906, 112
    %v1238 = vpop.permute.xlu0 %1237
    %1239 = vrot.lane.b32.xlu0 %v900, 80
    %v1240 = vpop.permute.xlu0 %1239
    %v1241 = vsel %vm151, %v1238, 0
    %v1243 = vsel %vm151, %v1240, 0
    %1245 = vmatprep.subr.mxu0 0.0
    %1246 = vmatpush1.xpose.msra.mxu0 0.0
    %1247 = vmatprep.subr.mxu0 0.0
    %1248 = vmatpush1.xpose.msra.mxu0 0.0
    %1249 = vmatprep.subr.mxu0 0.0
    %1250 = vmatpush1.xpose.msra.mxu0 0.0
    %1251 = vmatprep.subr.mxu0 0.0
    %1252 = vmatpush1.xpose.msra.mxu0 0.0
    %1253 = vmatprep.subr.mxu0 0.0
    %1254 = vmatpush1.xpose.msra.mxu0 0.0
    %1255 = vmatprep.subr.mxu0 0.0
    %1256 = vmatpush1.xpose.msra.mxu0 0.0
    %1257 = vmatprep.subr.mxu0 0.0
    %1258 = vmatpush1.xpose.msra.mxu0 0.0
    %1259 = vmatprep.subr.mxu0 0.0
    %1260 = vmatpush1.xpose.msra.mxu0 0.0
    %1261 = vmatprep.subr.mxu0 0.0
    %1262 = vmatpush1.xpose.msra.mxu0 0.0
    %1263 = vmatprep.subr.mxu0 0.0
    %1264 = vmatpush1.xpose.msra.mxu0 0.0
    %1265 = vmatprep.subr.mxu0 0.0
    %1266 = vmatpush1.xpose.msra.mxu0 0.0
    %1267 = vmatprep.subr.mxu0 0.0
    %1268 = vmatpush1.xpose.msra.mxu0 0.0
    %1269 = vmatprep.subr.mxu0 0.0
    %1270 = vmatpush1.xpose.msra.mxu0 0.0
    %1271 = vmatprep.subr.mxu0 0.0
    %1272 = vmatpush1.xpose.msra.mxu0 0.0
    %1273 = vmatprep.subr.mxu0 0.0
    %1274 = vmatpush1.xpose.msra.mxu0 0.0
    %1275 = vmatprep.subr.mxu0 0.0
    %1276 = vmatpush1.xpose.msra.mxu0 %v1243
    %1277 = vmatprep.subr.mxu0 0.0
    %1278 = vmatpush2.xpose.msra.mxu0 0.0
    %1279 = vmatprep.subr.mxu0 0.0
    %1280 = vmatpush2.xpose.msra.mxu0 0.0
    %1281 = vmatprep.subr.mxu0 0.0
    %1282 = vmatpush2.xpose.msra.mxu0 0.0
    %1283 = vmatprep.subr.mxu0 0.0
    %1284 = vmatpush2.xpose.msra.mxu0 0.0
    %1285 = vmatprep.subr.mxu0 0.0
    %1286 = vmatpush2.xpose.msra.mxu0 0.0
    %1287 = vmatprep.subr.mxu0 0.0
    %1288 = vmatpush2.xpose.msra.mxu0 0.0
    %1289 = vmatprep.subr.mxu0 0.0
    %1290 = vmatpush2.xpose.msra.mxu0 0.0
    %1291 = vmatprep.subr.mxu0 0.0
    %1292 = vmatpush2.xpose.msra.mxu0 0.0
    %1293 = vmatprep.subr.mxu0 0.0
    %1294 = vmatpush2.xpose.msra.mxu0 0.0
    %1295 = vmatprep.subr.mxu0 0.0
    %1296 = vmatpush2.xpose.msra.mxu0 0.0
    %1297 = vmatprep.subr.mxu0 0.0
    %1298 = vmatpush2.xpose.msra.mxu0 0.0
    %1299 = vmatprep.subr.mxu0 0.0
    %1300 = vmatpush2.xpose.msra.mxu0 0.0
    %1301 = vmatprep.subr.mxu0 0.0
    %1302 = vmatpush2.xpose.msra.mxu0 0.0
    %1303 = vmatprep.subr.mxu0 0.0
    %1304 = vmatpush2.xpose.msra.mxu0 0.0
    %1305 = vmatprep.subr.mxu0 0.0
    %1306 = vmatpush2.xpose.msra.mxu0 0.0
    %1307 = vmatprep.subr.mxu0 0.0
    %1308 = vmatpush2.xpose.msra.mxu0 0.0
    %1309 = vmatprep.mubr.f32.mxu0 0.0
    %1310 = vmatmul.mubr.f32.gmra.mxu0 %v1241
    %v1311 = vpop.f32.mrf.mxu0
    %v1312 = vadd.f32 %v905, %v1311
    %v1313 = vpop.f32.mrf.mxu0
    %1314 = vdwg.mxu0
    %v1315 = vsel %vm151, %v1312, -inf
    %1316 = vmax.xlane.f32.xlu0 %v1315
    %v1317 = vpop.xlane.xlu0 %1316
    %v1318 = vsub.f32 %v1312, %v1317
    %v1319 = vmul.f32 %v1318, 1.442695
    %v1320 = vpow.pop %v1319
    %v1321 = vsel %vm151, %v1320, 0.0
    %1322 = vadd.xlane.f32.xlu0 %v1321
    %v1323 = vpop.xlane.xlu0 %1322
    %v1324 = vrcp.pop %v1323
    %v1325 = vmul.f32 %v1320, %v1324
    %1326 = vrot.lane.b32.xlu0 %v900, 48
    %v1327 = vpop.permute.xlu0 %1326
    %v1330 = vsel %vm151, %v1325, 0
    %1332 = vmatprep.subr.mxu0 0.0
    %1333 = vmatpush1.msra.mxu0 0.0
    %1334 = vmatprep.subr.mxu0 0.0
    %1335 = vmatpush1.msra.mxu0 0.0
    %1336 = vmatprep.subr.mxu0 0.0
    %1337 = vmatpush1.msra.mxu0 0.0
    %1338 = vmatprep.subr.mxu0 0.0
    %1339 = vmatpush1.msra.mxu0 0.0
    %1340 = vmatprep.subr.mxu0 0.0
    %1341 = vmatpush1.msra.mxu0 0.0
    %1342 = vmatprep.subr.mxu0 0.0
    %1343 = vmatpush1.msra.mxu0 0.0
    %1344 = vmatprep.subr.mxu0 0.0
    %1345 = vmatpush1.msra.mxu0 0.0
    %1346 = vmatprep.subr.mxu0 0.0
    %1347 = vmatpush1.msra.mxu0 0.0
    %1348 = vmatprep.subr.mxu0 0.0
    %1349 = vmatpush1.msra.mxu0 0.0
    %1350 = vmatprep.subr.mxu0 0.0
    %1351 = vmatpush1.msra.mxu0 0.0
    %1352 = vmatprep.subr.mxu0 0.0
    %1353 = vmatpush1.msra.mxu0 0.0
    %1354 = vmatprep.subr.mxu0 0.0
    %1355 = vmatpush1.msra.mxu0 0.0
    %1356 = vmatprep.subr.mxu0 0.0
    %1357 = vmatpush1.msra.mxu0 0.0
    %1358 = vmatprep.subr.mxu0 0.0
    %1359 = vmatpush1.msra.mxu0 0.0
    %1360 = vmatprep.subr.mxu0 0.0
    %1361 = vmatpush1.msra.mxu0 0.0
    %1362 = vmatprep.subr.mxu0 0.0
    %1363 = vmatpush1.msra.mxu0 %v1327
    %1364 = vmatprep.subr.mxu0 0.0
    %1365 = vmatpush2.msra.mxu0 0.0
    %1366 = vmatprep.subr.mxu0 0.0
    %1367 = vmatpush2.msra.mxu0 0.0
    %1368 = vmatprep.subr.mxu0 0.0
    %1369 = vmatpush2.msra.mxu0 0.0
    %1370 = vmatprep.subr.mxu0 0.0
    %1371 = vmatpush2.msra.mxu0 0.0
    %1372 = vmatprep.subr.mxu0 0.0
    %1373 = vmatpush2.msra.mxu0 0.0
    %1374 = vmatprep.subr.mxu0 0.0
    %1375 = vmatpush2.msra.mxu0 0.0
    %1376 = vmatprep.subr.mxu0 0.0
    %1377 = vmatpush2.msra.mxu0 0.0
    %1378 = vmatprep.subr.mxu0 0.0
    %1379 = vmatpush2.msra.mxu0 0.0
    %1380 = vmatprep.subr.mxu0 0.0
    %1381 = vmatpush2.msra.mxu0 0.0
    %1382 = vmatprep.subr.mxu0 0.0
    %1383 = vmatpush2.msra.mxu0 0.0
    %1384 = vmatprep.subr.mxu0 0.0
    %1385 = vmatpush2.msra.mxu0 0.0
    %1386 = vmatprep.subr.mxu0 0.0
    %1387 = vmatpush2.msra.mxu0 0.0
    %1388 = vmatprep.subr.mxu0 0.0
    %1389 = vmatpush2.msra.mxu0 0.0
    %1390 = vmatprep.subr.mxu0 0.0
    %1391 = vmatpush2.msra.mxu0 0.0
    %1392 = vmatprep.subr.mxu0 0.0
    %1393 = vmatpush2.msra.mxu0 0.0
    %1394 = vmatprep.subr.mxu0 0.0
    %1395 = vmatpush2.msra.mxu0 0.0
    %1396 = vmatprep.mubr.f32.mxu0 0.0
    %1397 = vmatmul.mubr.f32.gmra.mxu0 %v1330
    %v1398 = vpop.f32.mrf.mxu0
    %v1399 = vadd.f32 0.0, %v1398
    %v1400 = vpop.f32.mrf.mxu0
    %1401 = vdwg.mxu0
    %1402 = vrot.lane.b32.xlu0 %v906, 104
    %v1403 = vpop.permute.xlu0 %1402
    %1404 = vrot.lane.b32.xlu0 %v900, 72
    %v1405 = vpop.permute.xlu0 %1404
    %v1406 = vsel %vm151, %v1403, 0
    %v1408 = vsel %vm151, %v1405, 0
    %1410 = vmatprep.subr.mxu0 0.0
    %1411 = vmatpush1.xpose.msra.mxu0 0.0
    %1412 = vmatprep.subr.mxu0 0.0
    %1413 = vmatpush1.xpose.msra.mxu0 0.0
    %1414 = vmatprep.subr.mxu0 0.0
    %1415 = vmatpush1.xpose.msra.mxu0 0.0
    %1416 = vmatprep.subr.mxu0 0.0
    %1417 = vmatpush1.xpose.msra.mxu0 0.0
    %1418 = vmatprep.subr.mxu0 0.0
    %1419 = vmatpush1.xpose.msra.mxu0 0.0
    %1420 = vmatprep.subr.mxu0 0.0
    %1421 = vmatpush1.xpose.msra.mxu0 0.0
    %1422 = vmatprep.subr.mxu0 0.0
    %1423 = vmatpush1.xpose.msra.mxu0 0.0
    %1424 = vmatprep.subr.mxu0 0.0
    %1425 = vmatpush1.xpose.msra.mxu0 0.0
    %1426 = vmatprep.subr.mxu0 0.0
    %1427 = vmatpush1.xpose.msra.mxu0 0.0
    %1428 = vmatprep.subr.mxu0 0.0
    %1429 = vmatpush1.xpose.msra.mxu0 0.0
    %1430 = vmatprep.subr.mxu0 0.0
    %1431 = vmatpush1.xpose.msra.mxu0 0.0
    %1432 = vmatprep.subr.mxu0 0.0
    %1433 = vmatpush1.xpose.msra.mxu0 0.0
    %1434 = vmatprep.subr.mxu0 0.0
    %1435 = vmatpush1.xpose.msra.mxu0 0.0
    %1436 = vmatprep.subr.mxu0 0.0
    %1437 = vmatpush1.xpose.msra.mxu0 0.0
    %1438 = vmatprep.subr.mxu0 0.0
    %1439 = vmatpush1.xpose.msra.mxu0 0.0
    %1440 = vmatprep.subr.mxu0 0.0
    %1441 = vmatpush1.xpose.msra.mxu0 %v1408
    %1442 = vmatprep.subr.mxu0 0.0
    %1443 = vmatpush2.xpose.msra.mxu0 0.0
    %1444 = vmatprep.subr.mxu0 0.0
    %1445 = vmatpush2.xpose.msra.mxu0 0.0
    %1446 = vmatprep.subr.mxu0 0.0
    %1447 = vmatpush2.xpose.msra.mxu0 0.0
    %1448 = vmatprep.subr.mxu0 0.0
    %1449 = vmatpush2.xpose.msra.mxu0 0.0
    %1450 = vmatprep.subr.mxu0 0.0
    %1451 = vmatpush2.xpose.msra.mxu0 0.0
    %1452 = vmatprep.subr.mxu0 0.0
    %1453 = vmatpush2.xpose.msra.mxu0 0.0
    %1454 = vmatprep.subr.mxu0 0.0
    %1455 = vmatpush2.xpose.msra.mxu0 0.0
    %1456 = vmatprep.subr.mxu0 0.0
    %1457 = vmatpush2.xpose.msra.mxu0 0.0
    %1458 = vmatprep.subr.mxu0 0.0
    %1459 = vmatpush2.xpose.msra.mxu0 0.0
    %1460 = vmatprep.subr.mxu0 0.0
    %1461 = vmatpush2.xpose.msra.mxu0 0.0
    %1462 = vmatprep.subr.mxu0 0.0
    %1463 = vmatpush2.xpose.msra.mxu0 0.0
    %1464 = vmatprep.subr.mxu0 0.0
    %1465 = vmatpush2.xpose.msra.mxu0 0.0
    %1466 = vmatprep.subr.mxu0 0.0
    %1467 = vmatpush2.xpose.msra.mxu0 0.0
    %1468 = vmatprep.subr.mxu0 0.0
    %1469 = vmatpush2.xpose.msra.mxu0 0.0
    %1470 = vmatprep.subr.mxu0 0.0
    %1471 = vmatpush2.xpose.msra.mxu0 0.0
    %1472 = vmatprep.subr.mxu0 0.0
    %1473 = vmatpush2.xpose.msra.mxu0 0.0
    %1474 = vmatprep.mubr.f32.mxu0 0.0
    %1475 = vmatmul.mubr.f32.gmra.mxu0 %v1406
    %v1476 = vpop.f32.mrf.mxu0
    %v1477 = vadd.f32 %v905, %v1476
    %v1478 = vpop.f32.mrf.mxu0
    %1479 = vdwg.mxu0
    %v1480 = vsel %vm151, %v1477, -inf
    %1481 = vmax.xlane.f32.xlu0 %v1480
    %v1482 = vpop.xlane.xlu0 %1481
    %v1483 = vsub.f32 %v1477, %v1482
    %v1484 = vmul.f32 %v1483, 1.442695
    %v1485 = vpow.pop %v1484
    %v1486 = vsel %vm151, %v1485, 0.0
    %1487 = vadd.xlane.f32.xlu0 %v1486
    %v1488 = vpop.xlane.xlu0 %1487
    %v1489 = vrcp.pop %v1488
    %v1490 = vmul.f32 %v1485, %v1489
    %1491 = vrot.lane.b32.xlu0 %v900, 40
    %v1492 = vpop.permute.xlu0 %1491
    %v1495 = vsel %vm151, %v1490, 0
    %1497 = vmatprep.subr.mxu0 0.0
    %1498 = vmatpush1.msra.mxu0 0.0
    %1499 = vmatprep.subr.mxu0 0.0
    %1500 = vmatpush1.msra.mxu0 0.0
    %1501 = vmatprep.subr.mxu0 0.0
    %1502 = vmatpush1.msra.mxu0 0.0
    %1503 = vmatprep.subr.mxu0 0.0
    %1504 = vmatpush1.msra.mxu0 0.0
    %1505 = vmatprep.subr.mxu0 0.0
    %1506 = vmatpush1.msra.mxu0 0.0
    %1507 = vmatprep.subr.mxu0 0.0
    %1508 = vmatpush1.msra.mxu0 0.0
    %1509 = vmatprep.subr.mxu0 0.0
    %1510 = vmatpush1.msra.mxu0 0.0
    %1511 = vmatprep.subr.mxu0 0.0
    %1512 = vmatpush1.msra.mxu0 0.0
    %1513 = vmatprep.subr.mxu0 0.0
    %1514 = vmatpush1.msra.mxu0 0.0
    %1515 = vmatprep.subr.mxu0 0.0
    %1516 = vmatpush1.msra.mxu0 0.0
    %1517 = vmatprep.subr.mxu0 0.0
    %1518 = vmatpush1.msra.mxu0 0.0
    %1519 = vmatprep.subr.mxu0 0.0
    %1520 = vmatpush1.msra.mxu0 0.0
    %1521 = vmatprep.subr.mxu0 0.0
    %1522 = vmatpush1.msra.mxu0 0.0
    %1523 = vmatprep.subr.mxu0 0.0
    %1524 = vmatpush1.msra.mxu0 0.0
    %1525 = vmatprep.subr.mxu0 0.0
    %1526 = vmatpush1.msra.mxu0 0.0
    %1527 = vmatprep.subr.mxu0 0.0
    %1528 = vmatpush1.msra.mxu0 %v1492
    %1529 = vmatprep.subr.mxu0 0.0
    %1530 = vmatpush2.msra.mxu0 0.0
    %1531 = vmatprep.subr.mxu0 0.0
    %1532 = vmatpush2.msra.mxu0 0.0
    %1533 = vmatprep.subr.mxu0 0.0
    %1534 = vmatpush2.msra.mxu0 0.0
    %1535 = vmatprep.subr.mxu0 0.0
    %1536 = vmatpush2.msra.mxu0 0.0
    %1537 = vmatprep.subr.mxu0 0.0
    %1538 = vmatpush2.msra.mxu0 0.0
    %1539 = vmatprep.subr.mxu0 0.0
    %1540 = vmatpush2.msra.mxu0 0.0
    %1541 = vmatprep.subr.mxu0 0.0
    %1542 = vmatpush2.msra.mxu0 0.0
    %1543 = vmatprep.subr.mxu0 0.0
    %1544 = vmatpush2.msra.mxu0 0.0
    %1545 = vmatprep.subr.mxu0 0.0
    %1546 = vmatpush2.msra.mxu0 0.0
    %1547 = vmatprep.subr.mxu0 0.0
    %1548 = vmatpush2.msra.mxu0 0.0
    %1549 = vmatprep.subr.mxu0 0.0
    %1550 = vmatpush2.msra.mxu0 0.0
    %1551 = vmatprep.subr.mxu0 0.0
    %1552 = vmatpush2.msra.mxu0 0.0
    %1553 = vmatprep.subr.mxu0 0.0
    %1554 = vmatpush2.msra.mxu0 0.0
    %1555 = vmatprep.subr.mxu0 0.0
    %1556 = vmatpush2.msra.mxu0 0.0
    %1557 = vmatprep.subr.mxu0 0.0
    %1558 = vmatpush2.msra.mxu0 0.0
    %1559 = vmatprep.subr.mxu0 0.0
    %1560 = vmatpush2.msra.mxu0 0.0
    %1561 = vmatprep.mubr.f32.mxu0 0.0
    %1562 = vmatmul.mubr.f32.gmra.mxu0 %v1495
    %v1563 = vpop.f32.mrf.mxu0
    %v1564 = vadd.f32 0.0, %v1563
    %v1565 = vpop.f32.mrf.mxu0
    %1566 = vdwg.mxu0
    %1568 = vrot.lane.b32.xlu0 %v1234, 8
    %v1569 = vpop.permute.xlu0 %1568
    %1572 = vrot.lane.b32.xlu0 %v1399, 16
    %v1573 = vpop.permute.xlu0 %1572
    %1576 = vrot.lane.b32.xlu0 %v1564, 24
    %v1577 = vpop.permute.xlu0 %1576
    %v1579 = vsel %vm151, %v1069, %v1569
    %v1580 = vsel %vm822, %v1579, %v1573
    %v1581 = vsel %vm824, %v1580, %v1577
    %v1582 = vadd.f32 %v1581, %v829
    %s1583 = scalar_lea.vmem [#allocation8], 8
    %1584 = vst.msk [vmem:[%s1583] sm:$0xff] %vm71, %v1582
    // Predicated region
    $region30: #{tpu_custom_call.1} parent=1 // pred_check
      _
    $region31: #{tpu_custom_call.1} parent=1 // pred_check_branch
      %1586 = sbr.rel (0) target = $region33
    $region32: #{tpu_custom_call.1} parent=1 // pred_region
      %s1588 = ssub.s32 256, 256
      %1589 = vsyncadd [#allocation4], %s1588
      %s1590 = sshll.u32 [#allocation8], 4
      %s1591 = int_to_ptr.vmem [resolvable:$true] %s1590
      %1596 = dma.vmem_to_hbm [thread:$0]  %s1591, 256, %s4, [#allocation4], 128, 128, 8
    $region33: #{tpu_custom_call.1} parent=1 // pred_fallthru
      _
    // Predicated region
    $region34: #{tpu_custom_call.1} parent=1 // pred_check
      _
    $region35: #{tpu_custom_call.1} parent=1 // pred_check_branch
      %1598 = sbr.rel (0) target = $region37
    $region36: #{tpu_custom_call.1} parent=1 // pred_region
      %1599 = dma.done [#allocation4], 256
    $region37: #{tpu_custom_call.1} parent=1 // pred_fallthru
      _
    %1600 = vsyncpa [#allocation3], 1
    %1601 = vsyncpa [#allocation6], 1
    %1602 = vsyncpa [#allocation4], 1

</llo_original>
